<compile_context>
chip_gen: v6e
topology: v6e:2x2x1
jax: 0.10.0
libtpu: 0.0.40
codegen_flags: <defaults>
</compile_context>

<pallas_src>
import functools

import jax
import jax.numpy as jnp
from jax.experimental import pallas as pl


# ----------------------------------------------------------------------------
# Fused kernel
# ----------------------------------------------------------------------------
def _cnn2_fused_kernel(x_ref, w1_ref, b1_ref, w2_ref, b2_ref, wl_ref, bl_ref,
                       o_ref, *, n_batch, hw_block, s1, s2, shifts):
    """Fused CNN2 forward.

    x_ref  : (C, LX)      f32   flat-spatial input, lane p = n*H*W + h*W + w,
                                 zero tail pad so shifted slices stay in bounds.
    w1_ref : (9, OC1, C)  bf16  tap k = i*3+j holds conv1 weight[:, :, i, j]
    b1_ref : (OC1, 1)     f32
    w2_ref : (9, OC2, OC1) bf16
    b2_ref : (OC2, 1)     f32
    wl_ref : (OC2, H*W)   f32   linear weight scattered onto the H*W grid
                                 (zero outside the valid OH2 x OW2 window)
    bl_ref : (1, 1)       f32
    o_ref  : (1, N)       f32
    """
    oc2 = w2_ref.shape[1]

    x = x_ref[...].astype(jnp.bfloat16)                        # (C, LX)

    # ---- conv1 + ReLU: 9 lane-shifted slices, accumulating MXU matmuls ----
    acc1 = None
    for k, s in enumerate(shifts):
        t = jnp.dot(w1_ref[k], x[:, s:s + s1],
                    preferred_element_type=jnp.float32)        # (OC1, s1) f32
        acc1 = t if acc1 is None else acc1 + t
    h1 = jnp.maximum(acc1 + b1_ref[...], 0.0).astype(jnp.bfloat16)

    # ---- conv2 + ReLU (same flat-spatial trick, same row stride W) --------
    acc2 = None
    for k, s in enumerate(shifts):
        t = jnp.dot(w2_ref[k], h1[:, s:s + s2],
                    preferred_element_type=jnp.float32)        # (OC2, s2) f32
        acc2 = t if acc2 is None else acc2 + t
    h2 = jnp.maximum(acc2 + b2_ref[...], 0.0)                  # (OC2, s2) f32

    # ---- linear: per-sample VPU multiply-reduce epilogue -------------------
    # wl is zero at spatial positions outside the valid conv2 output window,
    # so the "garbage" lanes of h2 contribute nothing.
    wl = wl_ref[...]                                           # (OC2, H*W)
    bl = bl_ref[...]                                           # (1, 1)
    for n in range(n_batch):
        block = h2[:, n * hw_block:(n + 1) * hw_block]         # (OC2, H*W)
        per_c = jnp.sum(block * wl, axis=1, keepdims=True)     # (OC2, 1)
        val = per_c[0:1, :]
        for c in range(1, oc2):
            val = val + per_c[c:c + 1, :]
        o_ref[0:1, n:n + 1] = val + bl


# ----------------------------------------------------------------------------
# Forward wrapper (single pallas_call; only the NCHW->flat boundary reshape
# and a zero pad happen outside the kernel, fused under jit).
# ----------------------------------------------------------------------------
@jax.jit
def cnn2_forward(x_nchw, kp):
    n, c, h, w = x_nchw.shape
    hw = h * w
    s2 = n * hw                          # conv2 / linear working lane width
    extra = -(-(2 * w + 2) // 64) * 64   # >= max tap shift (2*W + 2), 64-aligned
    s1 = s2 + extra                      # conv1 working lane width
    lx = s1 + extra                      # padded input lane width
    shifts = tuple(i * w + j for i in range(3) for j in range(3))

    # NCHW -> (C, N*H*W) flat-spatial at the public boundary, zero tail pad.
    x_flat = jnp.transpose(x_nchw, (1, 0, 2, 3)).reshape(c, s2)
    x_flat = jnp.pad(x_flat, ((0, 0), (0, lx - s2)))

    kernel = functools.partial(
        _cnn2_fused_kernel,
        n_batch=n, hw_block=hw, s1=s1, s2=s2, shifts=shifts)

    out = pl.pallas_call(
        kernel,
        out_shape=jax.ShapeDtypeStruct((1, n), jnp.float32),
        in_specs=[
            pl.BlockSpec((c, lx), lambda: (0, 0)),
            pl.BlockSpec(kp["w1p"].shape, lambda: (0, 0, 0)),
            pl.BlockSpec(kp["b1p"].shape, lambda: (0, 0)),
            pl.BlockSpec(kp["w2p"].shape, lambda: (0, 0, 0)),
            pl.BlockSpec(kp["b2p"].shape, lambda: (0, 0)),
            pl.BlockSpec(kp["wlp"].shape, lambda: (0, 0)),
            pl.BlockSpec(kp["blp"].shape, lambda: (0, 0)),
        ],
        out_specs=pl.BlockSpec((1, n), lambda: (0, 0)),
    )(x_flat, kp["w1p"], kp["b1p"], kp["w2p"], kp["b2p"], kp["wlp"], kp["blp"])
    return out.reshape(-1)               # matches torch.flatten


# ----------------------------------------------------------------------------
# Parameters: PyTorch-layout init, then a one-time prep into kernel layout.
# ----------------------------------------------------------------------------
def init_params(key, in_chan, out_chan, img_h, img_w):
    c_mid = 4 * out_chan
    oh, ow = img_h - 4, img_w - 4        # two valid 3x3 convs
    feat = out_chan * oh * ow
    ks = jax.random.split(key, 6)

    def u(k, shape, fan_in):
        bound = 1.0 / jnp.sqrt(fan_in)
        return jax.random.uniform(k, shape, jnp.float32, -bound, bound)

    return {
        "w1": u(ks[0], (c_mid, in_chan, 3, 3), in_chan * 9),
        "b1": u(ks[1], (c_mid,), in_chan * 9),
        "w2": u(ks[2], (out_chan, c_mid, 3, 3), c_mid * 9),
        "b2": u(ks[3], (out_chan,), c_mid * 9),
        "wl": u(ks[4], (1, feat), feat),
        "bl": u(ks[5], (1,), feat),
    }


def prepare_params(params, img_h, img_w):
    """One-time re-layout of PyTorch-style params into kernel-friendly form."""
    w1, w2 = params["w1"], params["w2"]
    oc1, cin = w1.shape[0], w1.shape[1]
    oc2 = w2.shape[0]
    oh, ow = img_h - 4, img_w - 4

    # conv weights: (OC, C, 3, 3) -> (9, OC, C) bf16, tap index k = i*3 + j.
    w1p = jnp.transpose(w1, (2, 3, 0, 1)).reshape(9, oc1, cin).astype(jnp.bfloat16)
    w2p = jnp.transpose(w2, (2, 3, 0, 1)).reshape(9, oc2, oc1).astype(jnp.bfloat16)
    b1p = params["b1"].reshape(oc1, 1).astype(jnp.float32)
    b2p = params["b2"].reshape(oc2, 1).astype(jnp.float32)

    # linear weight: (1, OC2*OH2*OW2) in (C, H, W) flatten order, scattered
    # onto the full H*W grid (zeros outside the valid OH2 x OW2 window).
    wl_grid = params["wl"].reshape(oc2, oh, ow).astype(jnp.float32)
    wl_block = jnp.zeros((oc2, img_h, img_w), jnp.float32)
    wl_block = wl_block.at[:, :oh, :ow].set(wl_grid)
    wlp = wl_block.reshape(oc2, img_h * img_w)
    blp = params["bl"].reshape(1, 1).astype(jnp.float32)

    return {"w1p": w1p, "b1p": b1p, "w2p": w2p, "b2p": b2p,
            "wlp": wlp, "blp": blp}


if __name__ == "__main__":
    # batch=2, in_chan=4, 16x16 image, out_chan=4:
    # conv1 -> 16ch 14x14, conv2 -> 4ch 12x12, linear 576 -> 1.
    batch, in_chan, out_chan, img = 2, 4, 4, 16

    key = jax.random.PRNGKey(0)
    k_in, k_p = jax.random.split(key)
    x = jax.random.normal(k_in, (batch, in_chan, img, img), jnp.float32)

    params = init_params(k_p, in_chan, out_chan, img, img)
    kp = prepare_params(params, img, img)

    out = cnn2_forward(x, kp)
    jax.block_until_ready(out)
    assert out.shape == (batch,), out.shape
    print("KERNEL_OK")
</pallas_src>

<mosaic_0001>
module attributes {stable_mosaic.version = 11 : i64} {
  func.func @_cnn2_fused_kernel(%arg0: memref<4x640xf32, #tpu.memory_space<vmem>>, %arg1: memref<9x16x4xbf16, #tpu.memory_space<vmem>>, %arg2: memref<16x1xf32, #tpu.memory_space<vmem>>, %arg3: memref<9x4x16xbf16, #tpu.memory_space<vmem>>, %arg4: memref<4x1xf32, #tpu.memory_space<vmem>>, %arg5: memref<4x256xf32, #tpu.memory_space<vmem>>, %arg6: memref<1x1xf32, #tpu.memory_space<vmem>>, %arg7: memref<1x2xf32, #tpu.memory_space<vmem>>) attributes {dimension_semantics = [], scalar_prefetch = 0 : i64, scratch_operands = 0 : i64, tpu.core_type = #tpu.core_type<tc>} {
    %c0 = arith.constant 0 : index
    %c0_0 = arith.constant 0 : index
    %0 = vector.load %arg0[%c0, %c0_0] : memref<4x640xf32, #tpu.memory_space<vmem>>, vector<4x640xf32>
    %1 = arith.truncf %0 : vector<4x640xf32> to vector<4x640xbf16>
    %c0_1 = arith.constant 0 : index
    %c0_2 = arith.constant 0 : index
    %c0_3 = arith.constant 0 : index
    %2 = vector.load %arg1[%c0_1, %c0_2, %c0_3] : memref<9x16x4xbf16, #tpu.memory_space<vmem>>, vector<1x16x4xbf16>
    %3 = vector.shape_cast %2 : vector<1x16x4xbf16> to vector<16x4xbf16>
    %4 = vector.extract_strided_slice %1 {offsets = [0, 0], sizes = [4, 576], strides = [1, 1]} : vector<4x640xbf16> to vector<4x576xbf16>
    %cst = arith.constant dense<0.000000e+00> : vector<16x576xf32>
    %5 = tpu.matmul %3, %4, %cst {dimension_numbers = #tpu.dot_dimension_numbers<[1], [0], [0], [1], [0, 0, 1, 1], [], []>} : vector<16x4xbf16>, vector<4x576xbf16>, vector<16x576xf32> -> vector<16x576xf32>
    %c1 = arith.constant 1 : index
    %c0_4 = arith.constant 0 : index
    %c0_5 = arith.constant 0 : index
    %6 = vector.load %arg1[%c1, %c0_4, %c0_5] : memref<9x16x4xbf16, #tpu.memory_space<vmem>>, vector<1x16x4xbf16>
    %7 = vector.shape_cast %6 : vector<1x16x4xbf16> to vector<16x4xbf16>
    %8 = vector.extract_strided_slice %1 {offsets = [0, 1], sizes = [4, 576], strides = [1, 1]} : vector<4x640xbf16> to vector<4x576xbf16>
    %cst_6 = arith.constant dense<0.000000e+00> : vector<16x576xf32>
    %9 = tpu.matmul %7, %8, %cst_6 {dimension_numbers = #tpu.dot_dimension_numbers<[1], [0], [0], [1], [0, 0, 1, 1], [], []>} : vector<16x4xbf16>, vector<4x576xbf16>, vector<16x576xf32> -> vector<16x576xf32>
    %10 = arith.addf %5, %9 : vector<16x576xf32>
    %c2 = arith.constant 2 : index
    %c0_7 = arith.constant 0 : index
    %c0_8 = arith.constant 0 : index
    %11 = vector.load %arg1[%c2, %c0_7, %c0_8] : memref<9x16x4xbf16, #tpu.memory_space<vmem>>, vector<1x16x4xbf16>
    %12 = vector.shape_cast %11 : vector<1x16x4xbf16> to vector<16x4xbf16>
    %13 = vector.extract_strided_slice %1 {offsets = [0, 2], sizes = [4, 576], strides = [1, 1]} : vector<4x640xbf16> to vector<4x576xbf16>
    %cst_9 = arith.constant dense<0.000000e+00> : vector<16x576xf32>
    %14 = tpu.matmul %12, %13, %cst_9 {dimension_numbers = #tpu.dot_dimension_numbers<[1], [0], [0], [1], [0, 0, 1, 1], [], []>} : vector<16x4xbf16>, vector<4x576xbf16>, vector<16x576xf32> -> vector<16x576xf32>
    %15 = arith.addf %10, %14 : vector<16x576xf32>
    %c3 = arith.constant 3 : index
    %c0_10 = arith.constant 0 : index
    %c0_11 = arith.constant 0 : index
    %16 = vector.load %arg1[%c3, %c0_10, %c0_11] : memref<9x16x4xbf16, #tpu.memory_space<vmem>>, vector<1x16x4xbf16>
    %17 = vector.shape_cast %16 : vector<1x16x4xbf16> to vector<16x4xbf16>
    %18 = vector.extract_strided_slice %1 {offsets = [0, 16], sizes = [4, 576], strides = [1, 1]} : vector<4x640xbf16> to vector<4x576xbf16>
    %cst_12 = arith.constant dense<0.000000e+00> : vector<16x576xf32>
    %19 = tpu.matmul %17, %18, %cst_12 {dimension_numbers = #tpu.dot_dimension_numbers<[1], [0], [0], [1], [0, 0, 1, 1], [], []>} : vector<16x4xbf16>, vector<4x576xbf16>, vector<16x576xf32> -> vector<16x576xf32>
    %20 = arith.addf %15, %19 : vector<16x576xf32>
    %c4 = arith.constant 4 : index
    %c0_13 = arith.constant 0 : index
    %c0_14 = arith.constant 0 : index
    %21 = vector.load %arg1[%c4, %c0_13, %c0_14] : memref<9x16x4xbf16, #tpu.memory_space<vmem>>, vector<1x16x4xbf16>
    %22 = vector.shape_cast %21 : vector<1x16x4xbf16> to vector<16x4xbf16>
    %23 = vector.extract_strided_slice %1 {offsets = [0, 17], sizes = [4, 576], strides = [1, 1]} : vector<4x640xbf16> to vector<4x576xbf16>
    %cst_15 = arith.constant dense<0.000000e+00> : vector<16x576xf32>
    %24 = tpu.matmul %22, %23, %cst_15 {dimension_numbers = #tpu.dot_dimension_numbers<[1], [0], [0], [1], [0, 0, 1, 1], [], []>} : vector<16x4xbf16>, vector<4x576xbf16>, vector<16x576xf32> -> vector<16x576xf32>
    %25 = arith.addf %20, %24 : vector<16x576xf32>
    %c5 = arith.constant 5 : index
    %c0_16 = arith.constant 0 : index
    %c0_17 = arith.constant 0 : index
    %26 = vector.load %arg1[%c5, %c0_16, %c0_17] : memref<9x16x4xbf16, #tpu.memory_space<vmem>>, vector<1x16x4xbf16>
    %27 = vector.shape_cast %26 : vector<1x16x4xbf16> to vector<16x4xbf16>
    %28 = vector.extract_strided_slice %1 {offsets = [0, 18], sizes = [4, 576], strides = [1, 1]} : vector<4x640xbf16> to vector<4x576xbf16>
    %cst_18 = arith.constant dense<0.000000e+00> : vector<16x576xf32>
    %29 = tpu.matmul %27, %28, %cst_18 {dimension_numbers = #tpu.dot_dimension_numbers<[1], [0], [0], [1], [0, 0, 1, 1], [], []>} : vector<16x4xbf16>, vector<4x576xbf16>, vector<16x576xf32> -> vector<16x576xf32>
    %30 = arith.addf %25, %29 : vector<16x576xf32>
    %c6 = arith.constant 6 : index
    %c0_19 = arith.constant 0 : index
    %c0_20 = arith.constant 0 : index
    %31 = vector.load %arg1[%c6, %c0_19, %c0_20] : memref<9x16x4xbf16, #tpu.memory_space<vmem>>, vector<1x16x4xbf16>
    %32 = vector.shape_cast %31 : vector<1x16x4xbf16> to vector<16x4xbf16>
    %33 = vector.extract_strided_slice %1 {offsets = [0, 32], sizes = [4, 576], strides = [1, 1]} : vector<4x640xbf16> to vector<4x576xbf16>
    %cst_21 = arith.constant dense<0.000000e+00> : vector<16x576xf32>
    %34 = tpu.matmul %32, %33, %cst_21 {dimension_numbers = #tpu.dot_dimension_numbers<[1], [0], [0], [1], [0, 0, 1, 1], [], []>} : vector<16x4xbf16>, vector<4x576xbf16>, vector<16x576xf32> -> vector<16x576xf32>
    %35 = arith.addf %30, %34 : vector<16x576xf32>
    %c7 = arith.constant 7 : index
    %c0_22 = arith.constant 0 : index
    %c0_23 = arith.constant 0 : index
    %36 = vector.load %arg1[%c7, %c0_22, %c0_23] : memref<9x16x4xbf16, #tpu.memory_space<vmem>>, vector<1x16x4xbf16>
    %37 = vector.shape_cast %36 : vector<1x16x4xbf16> to vector<16x4xbf16>
    %38 = vector.extract_strided_slice %1 {offsets = [0, 33], sizes = [4, 576], strides = [1, 1]} : vector<4x640xbf16> to vector<4x576xbf16>
    %cst_24 = arith.constant dense<0.000000e+00> : vector<16x576xf32>
    %39 = tpu.matmul %37, %38, %cst_24 {dimension_numbers = #tpu.dot_dimension_numbers<[1], [0], [0], [1], [0, 0, 1, 1], [], []>} : vector<16x4xbf16>, vector<4x576xbf16>, vector<16x576xf32> -> vector<16x576xf32>
    %40 = arith.addf %35, %39 : vector<16x576xf32>
    %c8 = arith.constant 8 : index
    %c0_25 = arith.constant 0 : index
    %c0_26 = arith.constant 0 : index
    %41 = vector.load %arg1[%c8, %c0_25, %c0_26] : memref<9x16x4xbf16, #tpu.memory_space<vmem>>, vector<1x16x4xbf16>
    %42 = vector.shape_cast %41 : vector<1x16x4xbf16> to vector<16x4xbf16>
    %43 = vector.extract_strided_slice %1 {offsets = [0, 34], sizes = [4, 576], strides = [1, 1]} : vector<4x640xbf16> to vector<4x576xbf16>
    %cst_27 = arith.constant dense<0.000000e+00> : vector<16x576xf32>
    %44 = tpu.matmul %42, %43, %cst_27 {dimension_numbers = #tpu.dot_dimension_numbers<[1], [0], [0], [1], [0, 0, 1, 1], [], []>} : vector<16x4xbf16>, vector<4x576xbf16>, vector<16x576xf32> -> vector<16x576xf32>
    %45 = arith.addf %40, %44 : vector<16x576xf32>
    %c0_28 = arith.constant 0 : index
    %c0_29 = arith.constant 0 : index
    %46 = vector.load %arg2[%c0_28, %c0_29] : memref<16x1xf32, #tpu.memory_space<vmem>>, vector<16x1xf32>
    %47 = vector.broadcast %46 : vector<16x1xf32> to vector<16x576xf32>
    %48 = arith.addf %45, %47 : vector<16x576xf32>
    %cst_30 = arith.constant 0.000000e+00 : f32
    %49 = vector.broadcast %cst_30 : f32 to vector<16x576xf32>
    %50 = arith.maximumf %48, %49 : vector<16x576xf32>
    %51 = arith.truncf %50 : vector<16x576xf32> to vector<16x576xbf16>
    %c0_31 = arith.constant 0 : index
    %c0_32 = arith.constant 0 : index
    %c0_33 = arith.constant 0 : index
    %52 = vector.load %arg3[%c0_31, %c0_32, %c0_33] : memref<9x4x16xbf16, #tpu.memory_space<vmem>>, vector<1x4x16xbf16>
    %53 = vector.shape_cast %52 : vector<1x4x16xbf16> to vector<4x16xbf16>
    %54 = vector.extract_strided_slice %51 {offsets = [0, 0], sizes = [16, 512], strides = [1, 1]} : vector<16x576xbf16> to vector<16x512xbf16>
    %cst_34 = arith.constant dense<0.000000e+00> : vector<4x512xf32>
    %55 = tpu.matmul %53, %54, %cst_34 {dimension_numbers = #tpu.dot_dimension_numbers<[1], [0], [0], [1], [0, 0, 1, 1], [], []>} : vector<4x16xbf16>, vector<16x512xbf16>, vector<4x512xf32> -> vector<4x512xf32>
    %c1_35 = arith.constant 1 : index
    %c0_36 = arith.constant 0 : index
    %c0_37 = arith.constant 0 : index
    %56 = vector.load %arg3[%c1_35, %c0_36, %c0_37] : memref<9x4x16xbf16, #tpu.memory_space<vmem>>, vector<1x4x16xbf16>
    %57 = vector.shape_cast %56 : vector<1x4x16xbf16> to vector<4x16xbf16>
    %58 = vector.extract_strided_slice %51 {offsets = [0, 1], sizes = [16, 512], strides = [1, 1]} : vector<16x576xbf16> to vector<16x512xbf16>
    %cst_38 = arith.constant dense<0.000000e+00> : vector<4x512xf32>
    %59 = tpu.matmul %57, %58, %cst_38 {dimension_numbers = #tpu.dot_dimension_numbers<[1], [0], [0], [1], [0, 0, 1, 1], [], []>} : vector<4x16xbf16>, vector<16x512xbf16>, vector<4x512xf32> -> vector<4x512xf32>
    %60 = arith.addf %55, %59 : vector<4x512xf32>
    %c2_39 = arith.constant 2 : index
    %c0_40 = arith.constant 0 : index
    %c0_41 = arith.constant 0 : index
    %61 = vector.load %arg3[%c2_39, %c0_40, %c0_41] : memref<9x4x16xbf16, #tpu.memory_space<vmem>>, vector<1x4x16xbf16>
    %62 = vector.shape_cast %61 : vector<1x4x16xbf16> to vector<4x16xbf16>
    %63 = vector.extract_strided_slice %51 {offsets = [0, 2], sizes = [16, 512], strides = [1, 1]} : vector<16x576xbf16> to vector<16x512xbf16>
    %cst_42 = arith.constant dense<0.000000e+00> : vector<4x512xf32>
    %64 = tpu.matmul %62, %63, %cst_42 {dimension_numbers = #tpu.dot_dimension_numbers<[1], [0], [0], [1], [0, 0, 1, 1], [], []>} : vector<4x16xbf16>, vector<16x512xbf16>, vector<4x512xf32> -> vector<4x512xf32>
    %65 = arith.addf %60, %64 : vector<4x512xf32>
    %c3_43 = arith.constant 3 : index
    %c0_44 = arith.constant 0 : index
    %c0_45 = arith.constant 0 : index
    %66 = vector.load %arg3[%c3_43, %c0_44, %c0_45] : memref<9x4x16xbf16, #tpu.memory_space<vmem>>, vector<1x4x16xbf16>
    %67 = vector.shape_cast %66 : vector<1x4x16xbf16> to vector<4x16xbf16>
    %68 = vector.extract_strided_slice %51 {offsets = [0, 16], sizes = [16, 512], strides = [1, 1]} : vector<16x576xbf16> to vector<16x512xbf16>
    %cst_46 = arith.constant dense<0.000000e+00> : vector<4x512xf32>
    %69 = tpu.matmul %67, %68, %cst_46 {dimension_numbers = #tpu.dot_dimension_numbers<[1], [0], [0], [1], [0, 0, 1, 1], [], []>} : vector<4x16xbf16>, vector<16x512xbf16>, vector<4x512xf32> -> vector<4x512xf32>
    %70 = arith.addf %65, %69 : vector<4x512xf32>
    %c4_47 = arith.constant 4 : index
    %c0_48 = arith.constant 0 : index
    %c0_49 = arith.constant 0 : index
    %71 = vector.load %arg3[%c4_47, %c0_48, %c0_49] : memref<9x4x16xbf16, #tpu.memory_space<vmem>>, vector<1x4x16xbf16>
    %72 = vector.shape_cast %71 : vector<1x4x16xbf16> to vector<4x16xbf16>
    %73 = vector.extract_strided_slice %51 {offsets = [0, 17], sizes = [16, 512], strides = [1, 1]} : vector<16x576xbf16> to vector<16x512xbf16>
    %cst_50 = arith.constant dense<0.000000e+00> : vector<4x512xf32>
    %74 = tpu.matmul %72, %73, %cst_50 {dimension_numbers = #tpu.dot_dimension_numbers<[1], [0], [0], [1], [0, 0, 1, 1], [], []>} : vector<4x16xbf16>, vector<16x512xbf16>, vector<4x512xf32> -> vector<4x512xf32>
    %75 = arith.addf %70, %74 : vector<4x512xf32>
    %c5_51 = arith.constant 5 : index
    %c0_52 = arith.constant 0 : index
    %c0_53 = arith.constant 0 : index
    %76 = vector.load %arg3[%c5_51, %c0_52, %c0_53] : memref<9x4x16xbf16, #tpu.memory_space<vmem>>, vector<1x4x16xbf16>
    %77 = vector.shape_cast %76 : vector<1x4x16xbf16> to vector<4x16xbf16>
    %78 = vector.extract_strided_slice %51 {offsets = [0, 18], sizes = [16, 512], strides = [1, 1]} : vector<16x576xbf16> to vector<16x512xbf16>
    %cst_54 = arith.constant dense<0.000000e+00> : vector<4x512xf32>
    %79 = tpu.matmul %77, %78, %cst_54 {dimension_numbers = #tpu.dot_dimension_numbers<[1], [0], [0], [1], [0, 0, 1, 1], [], []>} : vector<4x16xbf16>, vector<16x512xbf16>, vector<4x512xf32> -> vector<4x512xf32>
    %80 = arith.addf %75, %79 : vector<4x512xf32>
    %c6_55 = arith.constant 6 : index
    %c0_56 = arith.constant 0 : index
    %c0_57 = arith.constant 0 : index
    %81 = vector.load %arg3[%c6_55, %c0_56, %c0_57] : memref<9x4x16xbf16, #tpu.memory_space<vmem>>, vector<1x4x16xbf16>
    %82 = vector.shape_cast %81 : vector<1x4x16xbf16> to vector<4x16xbf16>
    %83 = vector.extract_strided_slice %51 {offsets = [0, 32], sizes = [16, 512], strides = [1, 1]} : vector<16x576xbf16> to vector<16x512xbf16>
    %cst_58 = arith.constant dense<0.000000e+00> : vector<4x512xf32>
    %84 = tpu.matmul %82, %83, %cst_58 {dimension_numbers = #tpu.dot_dimension_numbers<[1], [0], [0], [1], [0, 0, 1, 1], [], []>} : vector<4x16xbf16>, vector<16x512xbf16>, vector<4x512xf32> -> vector<4x512xf32>
    %85 = arith.addf %80, %84 : vector<4x512xf32>
    %c7_59 = arith.constant 7 : index
    %c0_60 = arith.constant 0 : index
    %c0_61 = arith.constant 0 : index
    %86 = vector.load %arg3[%c7_59, %c0_60, %c0_61] : memref<9x4x16xbf16, #tpu.memory_space<vmem>>, vector<1x4x16xbf16>
    %87 = vector.shape_cast %86 : vector<1x4x16xbf16> to vector<4x16xbf16>
    %88 = vector.extract_strided_slice %51 {offsets = [0, 33], sizes = [16, 512], strides = [1, 1]} : vector<16x576xbf16> to vector<16x512xbf16>
    %cst_62 = arith.constant dense<0.000000e+00> : vector<4x512xf32>
    %89 = tpu.matmul %87, %88, %cst_62 {dimension_numbers = #tpu.dot_dimension_numbers<[1], [0], [0], [1], [0, 0, 1, 1], [], []>} : vector<4x16xbf16>, vector<16x512xbf16>, vector<4x512xf32> -> vector<4x512xf32>
    %90 = arith.addf %85, %89 : vector<4x512xf32>
    %c8_63 = arith.constant 8 : index
    %c0_64 = arith.constant 0 : index
    %c0_65 = arith.constant 0 : index
    %91 = vector.load %arg3[%c8_63, %c0_64, %c0_65] : memref<9x4x16xbf16, #tpu.memory_space<vmem>>, vector<1x4x16xbf16>
    %92 = vector.shape_cast %91 : vector<1x4x16xbf16> to vector<4x16xbf16>
    %93 = vector.extract_strided_slice %51 {offsets = [0, 34], sizes = [16, 512], strides = [1, 1]} : vector<16x576xbf16> to vector<16x512xbf16>
    %cst_66 = arith.constant dense<0.000000e+00> : vector<4x512xf32>
    %94 = tpu.matmul %92, %93, %cst_66 {dimension_numbers = #tpu.dot_dimension_numbers<[1], [0], [0], [1], [0, 0, 1, 1], [], []>} : vector<4x16xbf16>, vector<16x512xbf16>, vector<4x512xf32> -> vector<4x512xf32>
    %95 = arith.addf %90, %94 : vector<4x512xf32>
    %c0_67 = arith.constant 0 : index
    %c0_68 = arith.constant 0 : index
    %96 = vector.load %arg4[%c0_67, %c0_68] : memref<4x1xf32, #tpu.memory_space<vmem>>, vector<4x1xf32>
    %97 = vector.broadcast %96 : vector<4x1xf32> to vector<4x512xf32>
    %98 = arith.addf %95, %97 : vector<4x512xf32>
    %cst_69 = arith.constant 0.000000e+00 : f32
    %99 = vector.broadcast %cst_69 : f32 to vector<4x512xf32>
    %100 = arith.maximumf %98, %99 : vector<4x512xf32>
    %c0_70 = arith.constant 0 : index
    %c0_71 = arith.constant 0 : index
    %101 = vector.load %arg5[%c0_70, %c0_71] : memref<4x256xf32, #tpu.memory_space<vmem>>, vector<4x256xf32>
    %c0_72 = arith.constant 0 : index
    %c0_73 = arith.constant 0 : index
    %102 = vector.load %arg6[%c0_72, %c0_73] : memref<1x1xf32, #tpu.memory_space<vmem>>, vector<1x1xf32>
    %103 = vector.extract_strided_slice %100 {offsets = [0, 0], sizes = [4, 256], strides = [1, 1]} : vector<4x512xf32> to vector<4x256xf32>
    %104 = arith.mulf %103, %101 : vector<4x256xf32>
    %cst_74 = arith.constant dense<0.000000e+00> : vector<4xf32>
    %105 = vector.multi_reduction <add>, %104, %cst_74 [1] : vector<4x256xf32> to vector<4xf32>
    %106 = vector.shape_cast %105 : vector<4xf32> to vector<4x1xf32>
    %107 = vector.extract_strided_slice %106 {offsets = [0, 0], sizes = [1, 1], strides = [1, 1]} : vector<4x1xf32> to vector<1x1xf32>
    %108 = vector.extract_strided_slice %106 {offsets = [1, 0], sizes = [1, 1], strides = [1, 1]} : vector<4x1xf32> to vector<1x1xf32>
    %109 = arith.addf %107, %108 : vector<1x1xf32>
    %110 = vector.extract_strided_slice %106 {offsets = [2, 0], sizes = [1, 1], strides = [1, 1]} : vector<4x1xf32> to vector<1x1xf32>
    %111 = arith.addf %109, %110 : vector<1x1xf32>
    %112 = vector.extract_strided_slice %106 {offsets = [3, 0], sizes = [1, 1], strides = [1, 1]} : vector<4x1xf32> to vector<1x1xf32>
    %113 = arith.addf %111, %112 : vector<1x1xf32>
    %114 = arith.addf %113, %102 : vector<1x1xf32>
    %c0_75 = arith.constant 0 : index
    %c0_76 = arith.constant 0 : index
    %115 = vector.load %arg7[%c0_75, %c0_76] : memref<1x2xf32, #tpu.memory_space<vmem>>, vector<1x1xf32>
    tpu.vector_store %arg7[%c0_75, %c0_76], %114 {strides = array<i32>} : memref<1x2xf32, #tpu.memory_space<vmem>>, vector<1x1xf32>,
    %116 = vector.extract_strided_slice %100 {offsets = [0, 256], sizes = [4, 256], strides = [1, 1]} : vector<4x512xf32> to vector<4x256xf32>
    %117 = arith.mulf %116, %101 : vector<4x256xf32>
    %cst_77 = arith.constant dense<0.000000e+00> : vector<4xf32>
    %118 = vector.multi_reduction <add>, %117, %cst_77 [1] : vector<4x256xf32> to vector<4xf32>
    %119 = vector.shape_cast %118 : vector<4xf32> to vector<4x1xf32>
    %120 = vector.extract_strided_slice %119 {offsets = [0, 0], sizes = [1, 1], strides = [1, 1]} : vector<4x1xf32> to vector<1x1xf32>
    %121 = vector.extract_strided_slice %119 {offsets = [1, 0], sizes = [1, 1], strides = [1, 1]} : vector<4x1xf32> to vector<1x1xf32>
    %122 = arith.addf %120, %121 : vector<1x1xf32>
    %123 = vector.extract_strided_slice %119 {offsets = [2, 0], sizes = [1, 1], strides = [1, 1]} : vector<4x1xf32> to vector<1x1xf32>
    %124 = arith.addf %122, %123 : vector<1x1xf32>
    %125 = vector.extract_strided_slice %119 {offsets = [3, 0], sizes = [1, 1], strides = [1, 1]} : vector<4x1xf32> to vector<1x1xf32>
    %126 = arith.addf %124, %125 : vector<1x1xf32>
    %127 = arith.addf %126, %102 : vector<1x1xf32>
    %c0_78 = arith.constant 0 : index
    %c1_79 = arith.constant 1 : index
    %128 = vector.load %arg7[%c0_78, %c1_79] : memref<1x2xf32, #tpu.memory_space<vmem>>, vector<1x1xf32>
    tpu.vector_store %arg7[%c0_78, %c1_79], %127 {strides = array<i32>} : memref<1x2xf32, #tpu.memory_space<vmem>>, vector<1x1xf32>,
    return
  }
}

</mosaic_0001>

<llo_original>
// kernel: cnn2_forward.1
$region0: #{cnn2_forward.1}
  #allocation0 [shape = 'u32[]', space=smem, size = 0x4, offset = 0x4, fixed_abs, tag = 'smem constant byte address 0x4 - core index']
  #allocation1 [shape = 'u32[144,128]{1,0:T(1,128)}', space=vmem, size = 0x12000, scoped, tag = 'internal scratch']
  #allocation2 [shape = 'f32[1,1]{1,0:T(1,128)S(1)}', space=vmem, size = 0x200, scoped, tag = 'scoped memory for cnn2_forward.1']
  %s0 = inlined_call_operand.vmem [shape: f32[4,640], index: 0, kind: input, shape index: {}]
  %s1 = inlined_call_operand.vmem [shape: bf16[9,16,4], index: 1, kind: input, shape index: {}]
  %s2 = inlined_call_operand.vmem [shape: f32[16,1], index: 2, kind: input, shape index: {}]
  %s3 = inlined_call_operand.vmem [shape: bf16[9,4,16], index: 3, kind: input, shape index: {}]
  %s4 = inlined_call_operand.vmem [shape: f32[4,1], index: 4, kind: input, shape index: {}]
  %s5 = inlined_call_operand.vmem [shape: f32[4,256], index: 5, kind: input, shape index: {}]
  %s6 = inlined_call_operand.<no memory space> [shape: f32[1,1], index: 6, kind: input, shape index: {}]
  %s7 = inlined_call_operand.hbm [shape: f32[1,2], index: 7, kind: output, shape index: {}]
  %s8 = sld [smem:[#allocation0]]
  $region38: #{cnn2_forward.1} parent=0
    _
  %s10 = ssub.s32 1, %s8
  %s11 = scalar_select 0, %s10, %s8
  %v12 = vstv %s6
  %13 = vst [vmem:[#allocation2] sm:$0x1] %v12
  $region1: #{cnn2_forward.1} parent=0
    #allocation3 [shape = 'u8[512]{0}', space=vmem, size = 0x400, scoped, tag = 'output window, operand 0, single buffered']
    #allocation4 [shape = 's32[1]{0}', space=sflag, size = 0x4, scoped, tag = 'scoped memory for cnn2_forward.1']
    %14 = vsyncpa [#allocation4], 0
    // Predicated region
    $region2: #{cnn2_forward.1} parent=1 // pred_check
      _
    $region3: #{cnn2_forward.1} parent=1 // pred_check_branch
      %16 = sbr.rel (0) target = $region5
    $region4: #{cnn2_forward.1} parent=1 // pred_region
      _
    $region5: #{cnn2_forward.1} parent=1 // pred_fallthru
      _
    // Predicated region
    $region6: #{cnn2_forward.1} parent=1 // pred_check
      _
    $region7: #{cnn2_forward.1} parent=1 // pred_check_branch
      %18 = sbr.rel (0) target = $region9
    $region8: #{cnn2_forward.1} parent=1 // pred_region
      _
    $region9: #{cnn2_forward.1} parent=1 // pred_fallthru
      _
    // Predicated region
    $region10: #{cnn2_forward.1} parent=1 // pred_check
      _
    $region11: #{cnn2_forward.1} parent=1 // pred_check_branch
      %20 = sbr.rel (0) target = $region13
    $region12: #{cnn2_forward.1} parent=1 // pred_region
      _
    $region13: #{cnn2_forward.1} parent=1 // pred_fallthru
      _
    // Predicated region
    $region14: #{cnn2_forward.1} parent=1 // pred_check
      _
    $region15: #{cnn2_forward.1} parent=1 // pred_check_branch
      %22 = sbr.rel (0) target = $region17
    $region16: #{cnn2_forward.1} parent=1 // pred_region
      _
    $region17: #{cnn2_forward.1} parent=1 // pred_fallthru
      _
    // Predicated region
    $region18: #{cnn2_forward.1} parent=1 // pred_check
      _
    $region19: #{cnn2_forward.1} parent=1 // pred_check_branch
      %24 = sbr.rel (0) target = $region21
    $region20: #{cnn2_forward.1} parent=1 // pred_region
      _
    $region21: #{cnn2_forward.1} parent=1 // pred_fallthru
      _
    // Predicated region
    $region22: #{cnn2_forward.1} parent=1 // pred_check
      _
    $region23: #{cnn2_forward.1} parent=1 // pred_check_branch
      %26 = sbr.rel (0) target = $region25
    $region24: #{cnn2_forward.1} parent=1 // pred_region
      _
    $region25: #{cnn2_forward.1} parent=1 // pred_fallthru
      _
    // Predicated region
    $region26: #{cnn2_forward.1} parent=1 // pred_check
      _
    $region27: #{cnn2_forward.1} parent=1 // pred_check_branch
      %28 = sbr.rel (0) target = $region29
    $region28: #{cnn2_forward.1} parent=1 // pred_region
      _
    $region29: #{cnn2_forward.1} parent=1 // pred_fallthru
      _
    %v30 = vld [vmem:[%s0] sm:$0xff]
    %v31 = vld [vmem:[%s0 + $0x8] sm:$0xff]
    %v32 = vld [vmem:[%s0 + $0x10] sm:$0xf]
    %v35 = vcombine.high %v30, %v30
    %v36 = vcombine.high %v31, %v31
    %v39 = vpack.c.bf16 %v30, %v30
    %v40 = vpack.c.bf16 %v35, %v35
    %v41 = vpack.c.bf16 %v31, %v31
    %v42 = vpack.c.bf16 %v36, %v36
    %v43 = vpack.c.bf16 %v32, %v32
    %v44 = vld [vmem:[%s1] sm:$0xf]
    %v45 = vld [vmem:[%s1 + $0x4] sm:$0xf]
    %s46 = scalar_lea.vmem %s1, 8
    %v47 = vld [vmem:[%s46] sm:$0xf]
    %v48 = vld [vmem:[%s46 + $0x4] sm:$0xf]
    %v51 = vunpack.c.l.b16 %v47
    %v52 = vunpack.c.l.b16 %v48
    %v53 = vpack.c.b16 %v52, %v51
    %59 = vrot.lane.b32.xlu0 %v39, 127
    %v60 = vpop.permute.xlu0 %59
    %61 = vrot.lane.b32.xlu0 %v40, 127
    %v62 = vpop.permute.xlu0 %61
    %63 = vrot.lane.b32.xlu0 %v41, 127
    %v64 = vpop.permute.xlu0 %63
    %65 = vrot.lane.b32.xlu0 %v42, 127
    %v66 = vpop.permute.xlu0 %65
    %67 = vrot.lane.b32.xlu0 %v43, 127
    %v68 = vpop.permute.xlu0 %67
    %vm69 = vcmask 1039360
    %v70 = vsel %vm69, %v60, %v62
    %v71 = vsel %vm69, %v62, %v64
    %v72 = vsel %vm69, %v64, %v66
    %v73 = vsel %vm69, %v66, %v68
    %vm74 = vcmask 31744
    %v76 = vsel %vm74, %v53, 0
    %vm78 = vcmask 1041408
    %v80 = vsel %vm78, %v70, 0
    %v83 = vsel %vm78, %v71, 0
    %v86 = vsel %vm78, %v72, 0
    %v89 = vsel %vm78, %v73, 0
    %v92 = vsel %vm78, %v68, 0
    %94 = vmatprep.subr.bf16.mxu0 0
    %95 = vmatpush1.bf16.msra.mxu0 0
    %96 = vmatprep.subr.bf16.mxu0 0
    %97 = vmatpush1.bf16.msra.mxu0 0
    %98 = vmatprep.subr.bf16.mxu0 0
    %99 = vmatpush1.bf16.msra.mxu0 0
    %100 = vmatprep.subr.bf16.mxu0 0
    %101 = vmatpush1.bf16.msra.mxu0 0
    %102 = vmatprep.subr.bf16.mxu0 0
    %103 = vmatpush1.bf16.msra.mxu0 0
    %104 = vmatprep.subr.bf16.mxu0 0
    %105 = vmatpush1.bf16.msra.mxu0 0
    %106 = vmatprep.subr.bf16.mxu0 0
    %107 = vmatpush1.bf16.msra.mxu0 0
    %108 = vmatprep.subr.bf16.mxu0 %v83
    %109 = vmatpush1.bf16.msra.mxu0 %v80
    %110 = vmatprep.subr.bf16.mxu0 0
    %111 = vmatpush2.bf16.msra.mxu0 0
    %112 = vmatprep.subr.bf16.mxu0 0
    %113 = vmatpush2.bf16.msra.mxu0 0
    %114 = vmatprep.subr.bf16.mxu0 0
    %115 = vmatpush2.bf16.msra.mxu0 0
    %116 = vmatprep.subr.bf16.mxu0 0
    %117 = vmatpush2.bf16.msra.mxu0 0
    %118 = vmatprep.subr.bf16.mxu0 0
    %119 = vmatpush2.bf16.msra.mxu0 0
    %120 = vmatprep.subr.bf16.mxu0 0
    %121 = vmatpush2.bf16.msra.mxu0 0
    %122 = vmatprep.subr.bf16.mxu0 0
    %123 = vmatpush2.bf16.msra.mxu0 0
    %124 = vmatprep.subr.bf16.mxu0 0
    %125 = vmatpush2.bf16.msra.mxu0 0
    %126 = vmatprep.mubr.bf16.mxu0 0
    %127 = vmatmul.mubr.bf16.gmra.mxu0 %v76
    %v128 = vpop.f32.mrf.mxu0
    %v129 = vadd.f32 0.0, %v128
    %v130 = vpop.f32.mrf.mxu0
    %v131 = vadd.f32 0.0, %v130
    %v132 = vpop.f32.mrf.mxu0
    %v133 = vadd.f32 0.0, %v132
    %v134 = vpop.f32.mrf.mxu0
    %v135 = vadd.f32 0.0, %v134
    %136 = vdwg.mxu0
    %137 = vmatprep.subr.bf16.mxu0 0
    %138 = vmatpush1.bf16.msra.mxu0 0
    %139 = vmatprep.subr.bf16.mxu0 0
    %140 = vmatpush1.bf16.msra.mxu0 0
    %141 = vmatprep.subr.bf16.mxu0 0
    %142 = vmatpush1.bf16.msra.mxu0 0
    %143 = vmatprep.subr.bf16.mxu0 0
    %144 = vmatpush1.bf16.msra.mxu0 0
    %145 = vmatprep.subr.bf16.mxu0 0
    %146 = vmatpush1.bf16.msra.mxu0 0
    %147 = vmatprep.subr.bf16.mxu0 0
    %148 = vmatpush1.bf16.msra.mxu0 0
    %149 = vmatprep.subr.bf16.mxu0 0
    %150 = vmatpush1.bf16.msra.mxu0 0
    %151 = vmatprep.subr.bf16.mxu0 %v89
    %152 = vmatpush1.bf16.msra.mxu0 %v86
    %153 = vmatprep.subr.bf16.mxu0 0
    %154 = vmatpush2.bf16.msra.mxu0 0
    %155 = vmatprep.subr.bf16.mxu0 0
    %156 = vmatpush2.bf16.msra.mxu0 0
    %157 = vmatprep.subr.bf16.mxu0 0
    %158 = vmatpush2.bf16.msra.mxu0 0
    %159 = vmatprep.subr.bf16.mxu0 0
    %160 = vmatpush2.bf16.msra.mxu0 0
    %161 = vmatprep.subr.bf16.mxu0 0
    %162 = vmatpush2.bf16.msra.mxu0 0
    %163 = vmatprep.subr.bf16.mxu0 0
    %164 = vmatpush2.bf16.msra.mxu0 0
    %165 = vmatprep.subr.bf16.mxu0 0
    %166 = vmatpush2.bf16.msra.mxu0 0
    %167 = vmatprep.subr.bf16.mxu0 0
    %168 = vmatpush2.bf16.msra.mxu0 0
    %169 = vmatprep.mubr.bf16.mxu0 0
    %170 = vmatmul.mubr.bf16.gmra.mxu0 %v76
    %v171 = vpop.f32.mrf.mxu0
    %v172 = vadd.f32 0.0, %v171
    %v173 = vpop.f32.mrf.mxu0
    %v174 = vadd.f32 0.0, %v173
    %v175 = vpop.f32.mrf.mxu0
    %v176 = vadd.f32 0.0, %v175
    %v177 = vpop.f32.mrf.mxu0
    %v178 = vadd.f32 0.0, %v177
    %179 = vdwg.mxu0
    %180 = vmatprep.subr.bf16.mxu0 0
    %181 = vmatpush1.bf16.msra.mxu0 0
    %182 = vmatprep.subr.bf16.mxu0 0
    %183 = vmatpush1.bf16.msra.mxu0 0
    %184 = vmatprep.subr.bf16.mxu0 0
    %185 = vmatpush1.bf16.msra.mxu0 0
    %186 = vmatprep.subr.bf16.mxu0 0
    %187 = vmatpush1.bf16.msra.mxu0 0
    %188 = vmatprep.subr.bf16.mxu0 0
    %189 = vmatpush1.bf16.msra.mxu0 0
    %190 = vmatprep.subr.bf16.mxu0 0
    %191 = vmatpush1.bf16.msra.mxu0 0
    %192 = vmatprep.subr.bf16.mxu0 0
    %193 = vmatpush1.bf16.msra.mxu0 0
    %194 = vmatprep.subr.bf16.mxu0 0
    %195 = vmatpush1.bf16.msra.mxu0 %v92
    %196 = vmatprep.subr.bf16.mxu0 0
    %197 = vmatpush2.bf16.msra.mxu0 0
    %198 = vmatprep.subr.bf16.mxu0 0
    %199 = vmatpush2.bf16.msra.mxu0 0
    %200 = vmatprep.subr.bf16.mxu0 0
    %201 = vmatpush2.bf16.msra.mxu0 0
    %202 = vmatprep.subr.bf16.mxu0 0
    %203 = vmatpush2.bf16.msra.mxu0 0
    %204 = vmatprep.subr.bf16.mxu0 0
    %205 = vmatpush2.bf16.msra.mxu0 0
    %206 = vmatprep.subr.bf16.mxu0 0
    %207 = vmatpush2.bf16.msra.mxu0 0
    %208 = vmatprep.subr.bf16.mxu0 0
    %209 = vmatpush2.bf16.msra.mxu0 0
    %210 = vmatprep.subr.bf16.mxu0 0
    %211 = vmatpush2.bf16.msra.mxu0 0
    %212 = vmatprep.mubr.bf16.mxu0 0
    %213 = vmatmul.mubr.bf16.gmra.mxu0 %v76
    %v214 = vpop.f32.mrf.mxu0
    %v215 = vadd.f32 0.0, %v214
    %v216 = vpop.f32.mrf.mxu0
    %v217 = vpop.f32.mrf.mxu0
    %v218 = vadd.f32 0.0, %v217
    %v219 = vpop.f32.mrf.mxu0
    %220 = vdwg.mxu0
    %v223 = vunpack.c.l.b16 %v44
    %v224 = vunpack.c.l.b16 %v45
    %v225 = vpack.c.b16 %v224, %v223
    %v227 = vsel %vm74, %v225, 0
    %v230 = vsel %vm78, %v39, 0
    %v233 = vsel %vm78, %v40, 0
    %v236 = vsel %vm78, %v41, 0
    %v239 = vsel %vm78, %v42, 0
    %v242 = vsel %vm78, %v43, 0
    %244 = vmatprep.subr.bf16.mxu0 0
    %245 = vmatpush1.bf16.msra.mxu0 0
    %246 = vmatprep.subr.bf16.mxu0 0
    %247 = vmatpush1.bf16.msra.mxu0 0
    %248 = vmatprep.subr.bf16.mxu0 0
    %249 = vmatpush1.bf16.msra.mxu0 0
    %250 = vmatprep.subr.bf16.mxu0 0
    %251 = vmatpush1.bf16.msra.mxu0 0
    %252 = vmatprep.subr.bf16.mxu0 0
    %253 = vmatpush1.bf16.msra.mxu0 0
    %254 = vmatprep.subr.bf16.mxu0 0
    %255 = vmatpush1.bf16.msra.mxu0 0
    %256 = vmatprep.subr.bf16.mxu0 0
    %257 = vmatpush1.bf16.msra.mxu0 0
    %258 = vmatprep.subr.bf16.mxu0 %v233
    %259 = vmatpush1.bf16.msra.mxu0 %v230
    %260 = vmatprep.subr.bf16.mxu0 0
    %261 = vmatpush2.bf16.msra.mxu0 0
    %262 = vmatprep.subr.bf16.mxu0 0
    %263 = vmatpush2.bf16.msra.mxu0 0
    %264 = vmatprep.subr.bf16.mxu0 0
    %265 = vmatpush2.bf16.msra.mxu0 0
    %266 = vmatprep.subr.bf16.mxu0 0
    %267 = vmatpush2.bf16.msra.mxu0 0
    %268 = vmatprep.subr.bf16.mxu0 0
    %269 = vmatpush2.bf16.msra.mxu0 0
    %270 = vmatprep.subr.bf16.mxu0 0
    %271 = vmatpush2.bf16.msra.mxu0 0
    %272 = vmatprep.subr.bf16.mxu0 0
    %273 = vmatpush2.bf16.msra.mxu0 0
    %274 = vmatprep.subr.bf16.mxu0 0
    %275 = vmatpush2.bf16.msra.mxu0 0
    %276 = vmatprep.mubr.bf16.mxu0 0
    %277 = vmatmul.mubr.bf16.gmra.mxu0 %v227
    %v278 = vpop.f32.mrf.mxu0
    %v279 = vadd.f32 %v129, %v278
    %v280 = vpop.f32.mrf.mxu0
    %v281 = vadd.f32 %v131, %v280
    %v282 = vpop.f32.mrf.mxu0
    %v283 = vadd.f32 %v133, %v282
    %v284 = vpop.f32.mrf.mxu0
    %v285 = vadd.f32 %v135, %v284
    %286 = vdwg.mxu0
    %287 = vmatprep.subr.bf16.mxu0 0
    %288 = vmatpush1.bf16.msra.mxu0 0
    %289 = vmatprep.subr.bf16.mxu0 0
    %290 = vmatpush1.bf16.msra.mxu0 0
    %291 = vmatprep.subr.bf16.mxu0 0
    %292 = vmatpush1.bf16.msra.mxu0 0
    %293 = vmatprep.subr.bf16.mxu0 0
    %294 = vmatpush1.bf16.msra.mxu0 0
    %295 = vmatprep.subr.bf16.mxu0 0
    %296 = vmatpush1.bf16.msra.mxu0 0
    %297 = vmatprep.subr.bf16.mxu0 0
    %298 = vmatpush1.bf16.msra.mxu0 0
    %299 = vmatprep.subr.bf16.mxu0 0
    %300 = vmatpush1.bf16.msra.mxu0 0
    %301 = vmatprep.subr.bf16.mxu0 %v239
    %302 = vmatpush1.bf16.msra.mxu0 %v236
    %303 = vmatprep.subr.bf16.mxu0 0
    %304 = vmatpush2.bf16.msra.mxu0 0
    %305 = vmatprep.subr.bf16.mxu0 0
    %306 = vmatpush2.bf16.msra.mxu0 0
    %307 = vmatprep.subr.bf16.mxu0 0
    %308 = vmatpush2.bf16.msra.mxu0 0
    %309 = vmatprep.subr.bf16.mxu0 0
    %310 = vmatpush2.bf16.msra.mxu0 0
    %311 = vmatprep.subr.bf16.mxu0 0
    %312 = vmatpush2.bf16.msra.mxu0 0
    %313 = vmatprep.subr.bf16.mxu0 0
    %314 = vmatpush2.bf16.msra.mxu0 0
    %315 = vmatprep.subr.bf16.mxu0 0
    %316 = vmatpush2.bf16.msra.mxu0 0
    %317 = vmatprep.subr.bf16.mxu0 0
    %318 = vmatpush2.bf16.msra.mxu0 0
    %319 = vmatprep.mubr.bf16.mxu0 0
    %320 = vmatmul.mubr.bf16.gmra.mxu0 %v227
    %v321 = vpop.f32.mrf.mxu0
    %v322 = vadd.f32 %v172, %v321
    %v323 = vpop.f32.mrf.mxu0
    %v324 = vadd.f32 %v174, %v323
    %v325 = vpop.f32.mrf.mxu0
    %v326 = vadd.f32 %v176, %v325
    %v327 = vpop.f32.mrf.mxu0
    %v328 = vadd.f32 %v178, %v327
    %329 = vdwg.mxu0
    %330 = vmatprep.subr.bf16.mxu0 0
    %331 = vmatpush1.bf16.msra.mxu0 0
    %332 = vmatprep.subr.bf16.mxu0 0
    %333 = vmatpush1.bf16.msra.mxu0 0
    %334 = vmatprep.subr.bf16.mxu0 0
    %335 = vmatpush1.bf16.msra.mxu0 0
    %336 = vmatprep.subr.bf16.mxu0 0
    %337 = vmatpush1.bf16.msra.mxu0 0
    %338 = vmatprep.subr.bf16.mxu0 0
    %339 = vmatpush1.bf16.msra.mxu0 0
    %340 = vmatprep.subr.bf16.mxu0 0
    %341 = vmatpush1.bf16.msra.mxu0 0
    %342 = vmatprep.subr.bf16.mxu0 0
    %343 = vmatpush1.bf16.msra.mxu0 0
    %344 = vmatprep.subr.bf16.mxu0 0
    %345 = vmatpush1.bf16.msra.mxu0 %v242
    %346 = vmatprep.subr.bf16.mxu0 0
    %347 = vmatpush2.bf16.msra.mxu0 0
    %348 = vmatprep.subr.bf16.mxu0 0
    %349 = vmatpush2.bf16.msra.mxu0 0
    %350 = vmatprep.subr.bf16.mxu0 0
    %351 = vmatpush2.bf16.msra.mxu0 0
    %352 = vmatprep.subr.bf16.mxu0 0
    %353 = vmatpush2.bf16.msra.mxu0 0
    %354 = vmatprep.subr.bf16.mxu0 0
    %355 = vmatpush2.bf16.msra.mxu0 0
    %356 = vmatprep.subr.bf16.mxu0 0
    %357 = vmatpush2.bf16.msra.mxu0 0
    %358 = vmatprep.subr.bf16.mxu0 0
    %359 = vmatpush2.bf16.msra.mxu0 0
    %360 = vmatprep.subr.bf16.mxu0 0
    %361 = vmatpush2.bf16.msra.mxu0 0
    %362 = vmatprep.mubr.bf16.mxu0 0
    %363 = vmatmul.mubr.bf16.gmra.mxu0 %v227
    %v364 = vpop.f32.mrf.mxu0
    %v365 = vadd.f32 %v215, %v364
    %v366 = vpop.f32.mrf.mxu0
    %v367 = vpop.f32.mrf.mxu0
    %v368 = vadd.f32 %v218, %v367
    %v369 = vpop.f32.mrf.mxu0
    %370 = vdwg.mxu0
    %s371 = scalar_lea.vmem %s1, 16
    %v372 = vld [vmem:[%s371] sm:$0xf]
    %v373 = vld [vmem:[%s371 + $0x4] sm:$0xf]
    %v376 = vunpack.c.l.b16 %v372
    %v377 = vunpack.c.l.b16 %v373
    %v378 = vpack.c.b16 %v377, %v376
    %379 = vrot.lane.b32.xlu0 %v39, 126
    %v380 = vpop.permute.xlu0 %379
    %381 = vrot.lane.b32.xlu0 %v40, 126
    %v382 = vpop.permute.xlu0 %381
    %383 = vrot.lane.b32.xlu0 %v41, 126
    %v384 = vpop.permute.xlu0 %383
    %385 = vrot.lane.b32.xlu0 %v42, 126
    %v386 = vpop.permute.xlu0 %385
    %387 = vrot.lane.b32.xlu0 %v43, 126
    %v388 = vpop.permute.xlu0 %387
    %vm389 = vcmask 1031168
    %v390 = vsel %vm389, %v380, %v382
    %v391 = vsel %vm389, %v382, %v384
    %v392 = vsel %vm389, %v384, %v386
    %v393 = vsel %vm389, %v386, %v388
    %v395 = vsel %vm74, %v378, 0
    %v398 = vsel %vm78, %v390, 0
    %v401 = vsel %vm78, %v391, 0
    %v404 = vsel %vm78, %v392, 0
    %v407 = vsel %vm78, %v393, 0
    %v410 = vsel %vm78, %v388, 0
    %412 = vmatprep.subr.bf16.mxu0 0
    %413 = vmatpush1.bf16.msra.mxu0 0
    %414 = vmatprep.subr.bf16.mxu0 0
    %415 = vmatpush1.bf16.msra.mxu0 0
    %416 = vmatprep.subr.bf16.mxu0 0
    %417 = vmatpush1.bf16.msra.mxu0 0
    %418 = vmatprep.subr.bf16.mxu0 0
    %419 = vmatpush1.bf16.msra.mxu0 0
    %420 = vmatprep.subr.bf16.mxu0 0
    %421 = vmatpush1.bf16.msra.mxu0 0
    %422 = vmatprep.subr.bf16.mxu0 0
    %423 = vmatpush1.bf16.msra.mxu0 0
    %424 = vmatprep.subr.bf16.mxu0 0
    %425 = vmatpush1.bf16.msra.mxu0 0
    %426 = vmatprep.subr.bf16.mxu0 %v401
    %427 = vmatpush1.bf16.msra.mxu0 %v398
    %428 = vmatprep.subr.bf16.mxu0 0
    %429 = vmatpush2.bf16.msra.mxu0 0
    %430 = vmatprep.subr.bf16.mxu0 0
    %431 = vmatpush2.bf16.msra.mxu0 0
    %432 = vmatprep.subr.bf16.mxu0 0
    %433 = vmatpush2.bf16.msra.mxu0 0
    %434 = vmatprep.subr.bf16.mxu0 0
    %435 = vmatpush2.bf16.msra.mxu0 0
    %436 = vmatprep.subr.bf16.mxu0 0
    %437 = vmatpush2.bf16.msra.mxu0 0
    %438 = vmatprep.subr.bf16.mxu0 0
    %439 = vmatpush2.bf16.msra.mxu0 0
    %440 = vmatprep.subr.bf16.mxu0 0
    %441 = vmatpush2.bf16.msra.mxu0 0
    %442 = vmatprep.subr.bf16.mxu0 0
    %443 = vmatpush2.bf16.msra.mxu0 0
    %444 = vmatprep.mubr.bf16.mxu0 0
    %445 = vmatmul.mubr.bf16.gmra.mxu0 %v395
    %v446 = vpop.f32.mrf.mxu0
    %v447 = vadd.f32 0.0, %v446
    %v448 = vpop.f32.mrf.mxu0
    %v449 = vadd.f32 0.0, %v448
    %v450 = vpop.f32.mrf.mxu0
    %v451 = vadd.f32 0.0, %v450
    %v452 = vpop.f32.mrf.mxu0
    %v453 = vadd.f32 0.0, %v452
    %454 = vdwg.mxu0
    %455 = vmatprep.subr.bf16.mxu0 0
    %456 = vmatpush1.bf16.msra.mxu0 0
    %457 = vmatprep.subr.bf16.mxu0 0
    %458 = vmatpush1.bf16.msra.mxu0 0
    %459 = vmatprep.subr.bf16.mxu0 0
    %460 = vmatpush1.bf16.msra.mxu0 0
    %461 = vmatprep.subr.bf16.mxu0 0
    %462 = vmatpush1.bf16.msra.mxu0 0
    %463 = vmatprep.subr.bf16.mxu0 0
    %464 = vmatpush1.bf16.msra.mxu0 0
    %465 = vmatprep.subr.bf16.mxu0 0
    %466 = vmatpush1.bf16.msra.mxu0 0
    %467 = vmatprep.subr.bf16.mxu0 0
    %468 = vmatpush1.bf16.msra.mxu0 0
    %469 = vmatprep.subr.bf16.mxu0 %v407
    %470 = vmatpush1.bf16.msra.mxu0 %v404
    %471 = vmatprep.subr.bf16.mxu0 0
    %472 = vmatpush2.bf16.msra.mxu0 0
    %473 = vmatprep.subr.bf16.mxu0 0
    %474 = vmatpush2.bf16.msra.mxu0 0
    %475 = vmatprep.subr.bf16.mxu0 0
    %476 = vmatpush2.bf16.msra.mxu0 0
    %477 = vmatprep.subr.bf16.mxu0 0
    %478 = vmatpush2.bf16.msra.mxu0 0
    %479 = vmatprep.subr.bf16.mxu0 0
    %480 = vmatpush2.bf16.msra.mxu0 0
    %481 = vmatprep.subr.bf16.mxu0 0
    %482 = vmatpush2.bf16.msra.mxu0 0
    %483 = vmatprep.subr.bf16.mxu0 0
    %484 = vmatpush2.bf16.msra.mxu0 0
    %485 = vmatprep.subr.bf16.mxu0 0
    %486 = vmatpush2.bf16.msra.mxu0 0
    %487 = vmatprep.mubr.bf16.mxu0 0
    %488 = vmatmul.mubr.bf16.gmra.mxu0 %v395
    %v489 = vpop.f32.mrf.mxu0
    %v490 = vadd.f32 0.0, %v489
    %v491 = vpop.f32.mrf.mxu0
    %v492 = vadd.f32 0.0, %v491
    %v493 = vpop.f32.mrf.mxu0
    %v494 = vadd.f32 0.0, %v493
    %v495 = vpop.f32.mrf.mxu0
    %v496 = vadd.f32 0.0, %v495
    %497 = vdwg.mxu0
    %498 = vmatprep.subr.bf16.mxu0 0
    %499 = vmatpush1.bf16.msra.mxu0 0
    %500 = vmatprep.subr.bf16.mxu0 0
    %501 = vmatpush1.bf16.msra.mxu0 0
    %502 = vmatprep.subr.bf16.mxu0 0
    %503 = vmatpush1.bf16.msra.mxu0 0
    %504 = vmatprep.subr.bf16.mxu0 0
    %505 = vmatpush1.bf16.msra.mxu0 0
    %506 = vmatprep.subr.bf16.mxu0 0
    %507 = vmatpush1.bf16.msra.mxu0 0
    %508 = vmatprep.subr.bf16.mxu0 0
    %509 = vmatpush1.bf16.msra.mxu0 0
    %510 = vmatprep.subr.bf16.mxu0 0
    %511 = vmatpush1.bf16.msra.mxu0 0
    %512 = vmatprep.subr.bf16.mxu0 0
    %513 = vmatpush1.bf16.msra.mxu0 %v410
    %514 = vmatprep.subr.bf16.mxu0 0
    %515 = vmatpush2.bf16.msra.mxu0 0
    %516 = vmatprep.subr.bf16.mxu0 0
    %517 = vmatpush2.bf16.msra.mxu0 0
    %518 = vmatprep.subr.bf16.mxu0 0
    %519 = vmatpush2.bf16.msra.mxu0 0
    %520 = vmatprep.subr.bf16.mxu0 0
    %521 = vmatpush2.bf16.msra.mxu0 0
    %522 = vmatprep.subr.bf16.mxu0 0
    %523 = vmatpush2.bf16.msra.mxu0 0
    %524 = vmatprep.subr.bf16.mxu0 0
    %525 = vmatpush2.bf16.msra.mxu0 0
    %526 = vmatprep.subr.bf16.mxu0 0
    %527 = vmatpush2.bf16.msra.mxu0 0
    %528 = vmatprep.subr.bf16.mxu0 0
    %529 = vmatpush2.bf16.msra.mxu0 0
    %530 = vmatprep.mubr.bf16.mxu0 0
    %531 = vmatmul.mubr.bf16.gmra.mxu0 %v395
    %v532 = vpop.f32.mrf.mxu0
    %v533 = vadd.f32 0.0, %v532
    %v534 = vpop.f32.mrf.mxu0
    %v535 = vpop.f32.mrf.mxu0
    %v536 = vadd.f32 0.0, %v535
    %v537 = vpop.f32.mrf.mxu0
    %538 = vdwg.mxu0
    %v539 = vadd.f32 %v279, %v447
    %v540 = vadd.f32 %v281, %v449
    %v541 = vadd.f32 %v322, %v490
    %v542 = vadd.f32 %v324, %v492
    %v543 = vadd.f32 %v365, %v533
    %v544 = vadd.f32 %v283, %v451
    %v545 = vadd.f32 %v285, %v453
    %v546 = vadd.f32 %v326, %v494
    %v547 = vadd.f32 %v328, %v496
    %v548 = vadd.f32 %v368, %v536
    %s549 = scalar_lea.vmem %s1, 24
    %v550 = vld [vmem:[%s549] sm:$0xf]
    %v551 = vld [vmem:[%s549 + $0x4] sm:$0xf]
    %v554 = vunpack.c.l.b16 %v550
    %v555 = vunpack.c.l.b16 %v551
    %v556 = vpack.c.b16 %v555, %v554
    %557 = vrot.lane.b32.xlu0 %v39, 112
    %v558 = vpop.permute.xlu0 %557
    %559 = vrot.lane.b32.xlu0 %v40, 112
    %v560 = vpop.permute.xlu0 %559
    %561 = vrot.lane.b32.xlu0 %v41, 112
    %v562 = vpop.permute.xlu0 %561
    %563 = vrot.lane.b32.xlu0 %v42, 112
    %v564 = vpop.permute.xlu0 %563
    %565 = vrot.lane.b32.xlu0 %v43, 112
    %v566 = vpop.permute.xlu0 %565
    %vm567 = vcmask 916480
    %v568 = vsel %vm567, %v558, %v560
    %v569 = vsel %vm567, %v560, %v562
    %v570 = vsel %vm567, %v562, %v564
    %v571 = vsel %vm567, %v564, %v566
    %v573 = vsel %vm74, %v556, 0
    %v576 = vsel %vm78, %v568, 0
    %v579 = vsel %vm78, %v569, 0
    %v582 = vsel %vm78, %v570, 0
    %v585 = vsel %vm78, %v571, 0
    %v588 = vsel %vm78, %v566, 0
    %590 = vmatprep.subr.bf16.mxu0 0
    %591 = vmatpush1.bf16.msra.mxu0 0
    %592 = vmatprep.subr.bf16.mxu0 0
    %593 = vmatpush1.bf16.msra.mxu0 0
    %594 = vmatprep.subr.bf16.mxu0 0
    %595 = vmatpush1.bf16.msra.mxu0 0
    %596 = vmatprep.subr.bf16.mxu0 0
    %597 = vmatpush1.bf16.msra.mxu0 0
    %598 = vmatprep.subr.bf16.mxu0 0
    %599 = vmatpush1.bf16.msra.mxu0 0
    %600 = vmatprep.subr.bf16.mxu0 0
    %601 = vmatpush1.bf16.msra.mxu0 0
    %602 = vmatprep.subr.bf16.mxu0 0
    %603 = vmatpush1.bf16.msra.mxu0 0
    %604 = vmatprep.subr.bf16.mxu0 %v579
    %605 = vmatpush1.bf16.msra.mxu0 %v576
    %606 = vmatprep.subr.bf16.mxu0 0
    %607 = vmatpush2.bf16.msra.mxu0 0
    %608 = vmatprep.subr.bf16.mxu0 0
    %609 = vmatpush2.bf16.msra.mxu0 0
    %610 = vmatprep.subr.bf16.mxu0 0
    %611 = vmatpush2.bf16.msra.mxu0 0
    %612 = vmatprep.subr.bf16.mxu0 0
    %613 = vmatpush2.bf16.msra.mxu0 0
    %614 = vmatprep.subr.bf16.mxu0 0
    %615 = vmatpush2.bf16.msra.mxu0 0
    %616 = vmatprep.subr.bf16.mxu0 0
    %617 = vmatpush2.bf16.msra.mxu0 0
    %618 = vmatprep.subr.bf16.mxu0 0
    %619 = vmatpush2.bf16.msra.mxu0 0
    %620 = vmatprep.subr.bf16.mxu0 0
    %621 = vmatpush2.bf16.msra.mxu0 0
    %622 = vmatprep.mubr.bf16.mxu0 0
    %623 = vmatmul.mubr.bf16.gmra.mxu0 %v573
    %v624 = vpop.f32.mrf.mxu0
    %v625 = vadd.f32 0.0, %v624
    %v626 = vpop.f32.mrf.mxu0
    %v627 = vadd.f32 0.0, %v626
    %v628 = vpop.f32.mrf.mxu0
    %v629 = vadd.f32 0.0, %v628
    %v630 = vpop.f32.mrf.mxu0
    %v631 = vadd.f32 0.0, %v630
    %632 = vdwg.mxu0
    %633 = vmatprep.subr.bf16.mxu0 0
    %634 = vmatpush1.bf16.msra.mxu0 0
    %635 = vmatprep.subr.bf16.mxu0 0
    %636 = vmatpush1.bf16.msra.mxu0 0
    %637 = vmatprep.subr.bf16.mxu0 0
    %638 = vmatpush1.bf16.msra.mxu0 0
    %639 = vmatprep.subr.bf16.mxu0 0
    %640 = vmatpush1.bf16.msra.mxu0 0
    %641 = vmatprep.subr.bf16.mxu0 0
    %642 = vmatpush1.bf16.msra.mxu0 0
    %643 = vmatprep.subr.bf16.mxu0 0
    %644 = vmatpush1.bf16.msra.mxu0 0
    %645 = vmatprep.subr.bf16.mxu0 0
    %646 = vmatpush1.bf16.msra.mxu0 0
    %647 = vmatprep.subr.bf16.mxu0 %v585
    %648 = vmatpush1.bf16.msra.mxu0 %v582
    %649 = vmatprep.subr.bf16.mxu0 0
    %650 = vmatpush2.bf16.msra.mxu0 0
    %651 = vmatprep.subr.bf16.mxu0 0
    %652 = vmatpush2.bf16.msra.mxu0 0
    %653 = vmatprep.subr.bf16.mxu0 0
    %654 = vmatpush2.bf16.msra.mxu0 0
    %655 = vmatprep.subr.bf16.mxu0 0
    %656 = vmatpush2.bf16.msra.mxu0 0
    %657 = vmatprep.subr.bf16.mxu0 0
    %658 = vmatpush2.bf16.msra.mxu0 0
    %659 = vmatprep.subr.bf16.mxu0 0
    %660 = vmatpush2.bf16.msra.mxu0 0
    %661 = vmatprep.subr.bf16.mxu0 0
    %662 = vmatpush2.bf16.msra.mxu0 0
    %663 = vmatprep.subr.bf16.mxu0 0
    %664 = vmatpush2.bf16.msra.mxu0 0
    %665 = vmatprep.mubr.bf16.mxu0 0
    %666 = vmatmul.mubr.bf16.gmra.mxu0 %v573
    %v667 = vpop.f32.mrf.mxu0
    %v668 = vadd.f32 0.0, %v667
    %v669 = vpop.f32.mrf.mxu0
    %v670 = vadd.f32 0.0, %v669
    %v671 = vpop.f32.mrf.mxu0
    %v672 = vadd.f32 0.0, %v671
    %v673 = vpop.f32.mrf.mxu0
    %v674 = vadd.f32 0.0, %v673
    %675 = vdwg.mxu0
    %676 = vmatprep.subr.bf16.mxu0 0
    %677 = vmatpush1.bf16.msra.mxu0 0
    %678 = vmatprep.subr.bf16.mxu0 0
    %679 = vmatpush1.bf16.msra.mxu0 0
    %680 = vmatprep.subr.bf16.mxu0 0
    %681 = vmatpush1.bf16.msra.mxu0 0
    %682 = vmatprep.subr.bf16.mxu0 0
    %683 = vmatpush1.bf16.msra.mxu0 0
    %684 = vmatprep.subr.bf16.mxu0 0
    %685 = vmatpush1.bf16.msra.mxu0 0
    %686 = vmatprep.subr.bf16.mxu0 0
    %687 = vmatpush1.bf16.msra.mxu0 0
    %688 = vmatprep.subr.bf16.mxu0 0
    %689 = vmatpush1.bf16.msra.mxu0 0
    %690 = vmatprep.subr.bf16.mxu0 0
    %691 = vmatpush1.bf16.msra.mxu0 %v588
    %692 = vmatprep.subr.bf16.mxu0 0
    %693 = vmatpush2.bf16.msra.mxu0 0
    %694 = vmatprep.subr.bf16.mxu0 0
    %695 = vmatpush2.bf16.msra.mxu0 0
    %696 = vmatprep.subr.bf16.mxu0 0
    %697 = vmatpush2.bf16.msra.mxu0 0
    %698 = vmatprep.subr.bf16.mxu0 0
    %699 = vmatpush2.bf16.msra.mxu0 0
    %700 = vmatprep.subr.bf16.mxu0 0
    %701 = vmatpush2.bf16.msra.mxu0 0
    %702 = vmatprep.subr.bf16.mxu0 0
    %703 = vmatpush2.bf16.msra.mxu0 0
    %704 = vmatprep.subr.bf16.mxu0 0
    %705 = vmatpush2.bf16.msra.mxu0 0
    %706 = vmatprep.subr.bf16.mxu0 0
    %707 = vmatpush2.bf16.msra.mxu0 0
    %708 = vmatprep.mubr.bf16.mxu0 0
    %709 = vmatmul.mubr.bf16.gmra.mxu0 %v573
    %v710 = vpop.f32.mrf.mxu0
    %v711 = vadd.f32 0.0, %v710
    %v712 = vpop.f32.mrf.mxu0
    %v713 = vpop.f32.mrf.mxu0
    %v714 = vadd.f32 0.0, %v713
    %v715 = vpop.f32.mrf.mxu0
    %716 = vdwg.mxu0
    %v717 = vadd.f32 %v539, %v625
    %v718 = vadd.f32 %v540, %v627
    %v719 = vadd.f32 %v541, %v668
    %v720 = vadd.f32 %v542, %v670
    %v721 = vadd.f32 %v543, %v711
    %v722 = vadd.f32 %v544, %v629
    %v723 = vadd.f32 %v545, %v631
    %v724 = vadd.f32 %v546, %v672
    %v725 = vadd.f32 %v547, %v674
    %v726 = vadd.f32 %v548, %v714
    %s727 = scalar_lea.vmem %s1, 32
    %v728 = vld [vmem:[%s727] sm:$0xf]
    %v729 = vld [vmem:[%s727 + $0x4] sm:$0xf]
    %v732 = vunpack.c.l.b16 %v728
    %v733 = vunpack.c.l.b16 %v729
    %v734 = vpack.c.b16 %v733, %v732
    %735 = vrot.lane.b32.xlu0 %v39, 111
    %v736 = vpop.permute.xlu0 %735
    %737 = vrot.lane.b32.xlu0 %v40, 111
    %v738 = vpop.permute.xlu0 %737
    %739 = vrot.lane.b32.xlu0 %v41, 111
    %v740 = vpop.permute.xlu0 %739
    %741 = vrot.lane.b32.xlu0 %v42, 111
    %v742 = vpop.permute.xlu0 %741
    %743 = vrot.lane.b32.xlu0 %v43, 111
    %v744 = vpop.permute.xlu0 %743
    %vm745 = vcmask 908288
    %v746 = vsel %vm745, %v736, %v738
    %v747 = vsel %vm745, %v738, %v740
    %v748 = vsel %vm745, %v740, %v742
    %v749 = vsel %vm745, %v742, %v744
    %v751 = vsel %vm74, %v734, 0
    %v754 = vsel %vm78, %v746, 0
    %v757 = vsel %vm78, %v747, 0
    %v760 = vsel %vm78, %v748, 0
    %v763 = vsel %vm78, %v749, 0
    %v766 = vsel %vm78, %v744, 0
    %768 = vmatprep.subr.bf16.mxu0 0
    %769 = vmatpush1.bf16.msra.mxu0 0
    %770 = vmatprep.subr.bf16.mxu0 0
    %771 = vmatpush1.bf16.msra.mxu0 0
    %772 = vmatprep.subr.bf16.mxu0 0
    %773 = vmatpush1.bf16.msra.mxu0 0
    %774 = vmatprep.subr.bf16.mxu0 0
    %775 = vmatpush1.bf16.msra.mxu0 0
    %776 = vmatprep.subr.bf16.mxu0 0
    %777 = vmatpush1.bf16.msra.mxu0 0
    %778 = vmatprep.subr.bf16.mxu0 0
    %779 = vmatpush1.bf16.msra.mxu0 0
    %780 = vmatprep.subr.bf16.mxu0 0
    %781 = vmatpush1.bf16.msra.mxu0 0
    %782 = vmatprep.subr.bf16.mxu0 %v757
    %783 = vmatpush1.bf16.msra.mxu0 %v754
    %784 = vmatprep.subr.bf16.mxu0 0
    %785 = vmatpush2.bf16.msra.mxu0 0
    %786 = vmatprep.subr.bf16.mxu0 0
    %787 = vmatpush2.bf16.msra.mxu0 0
    %788 = vmatprep.subr.bf16.mxu0 0
    %789 = vmatpush2.bf16.msra.mxu0 0
    %790 = vmatprep.subr.bf16.mxu0 0
    %791 = vmatpush2.bf16.msra.mxu0 0
    %792 = vmatprep.subr.bf16.mxu0 0
    %793 = vmatpush2.bf16.msra.mxu0 0
    %794 = vmatprep.subr.bf16.mxu0 0
    %795 = vmatpush2.bf16.msra.mxu0 0
    %796 = vmatprep.subr.bf16.mxu0 0
    %797 = vmatpush2.bf16.msra.mxu0 0
    %798 = vmatprep.subr.bf16.mxu0 0
    %799 = vmatpush2.bf16.msra.mxu0 0
    %800 = vmatprep.mubr.bf16.mxu0 0
    %801 = vmatmul.mubr.bf16.gmra.mxu0 %v751
    %v802 = vpop.f32.mrf.mxu0
    %v803 = vadd.f32 0.0, %v802
    %v804 = vpop.f32.mrf.mxu0
    %v805 = vadd.f32 0.0, %v804
    %v806 = vpop.f32.mrf.mxu0
    %v807 = vadd.f32 0.0, %v806
    %v808 = vpop.f32.mrf.mxu0
    %v809 = vadd.f32 0.0, %v808
    %810 = vdwg.mxu0
    %811 = vmatprep.subr.bf16.mxu0 0
    %812 = vmatpush1.bf16.msra.mxu0 0
    %813 = vmatprep.subr.bf16.mxu0 0
    %814 = vmatpush1.bf16.msra.mxu0 0
    %815 = vmatprep.subr.bf16.mxu0 0
    %816 = vmatpush1.bf16.msra.mxu0 0
    %817 = vmatprep.subr.bf16.mxu0 0
    %818 = vmatpush1.bf16.msra.mxu0 0
    %819 = vmatprep.subr.bf16.mxu0 0
    %820 = vmatpush1.bf16.msra.mxu0 0
    %821 = vmatprep.subr.bf16.mxu0 0
    %822 = vmatpush1.bf16.msra.mxu0 0
    %823 = vmatprep.subr.bf16.mxu0 0
    %824 = vmatpush1.bf16.msra.mxu0 0
    %825 = vmatprep.subr.bf16.mxu0 %v763
    %826 = vmatpush1.bf16.msra.mxu0 %v760
    %827 = vmatprep.subr.bf16.mxu0 0
    %828 = vmatpush2.bf16.msra.mxu0 0
    %829 = vmatprep.subr.bf16.mxu0 0
    %830 = vmatpush2.bf16.msra.mxu0 0
    %831 = vmatprep.subr.bf16.mxu0 0
    %832 = vmatpush2.bf16.msra.mxu0 0
    %833 = vmatprep.subr.bf16.mxu0 0
    %834 = vmatpush2.bf16.msra.mxu0 0
    %835 = vmatprep.subr.bf16.mxu0 0
    %836 = vmatpush2.bf16.msra.mxu0 0
    %837 = vmatprep.subr.bf16.mxu0 0
    %838 = vmatpush2.bf16.msra.mxu0 0
    %839 = vmatprep.subr.bf16.mxu0 0
    %840 = vmatpush2.bf16.msra.mxu0 0
    %841 = vmatprep.subr.bf16.mxu0 0
    %842 = vmatpush2.bf16.msra.mxu0 0
    %843 = vmatprep.mubr.bf16.mxu0 0
    %844 = vmatmul.mubr.bf16.gmra.mxu0 %v751
    %v845 = vpop.f32.mrf.mxu0
    %v846 = vadd.f32 0.0, %v845
    %v847 = vpop.f32.mrf.mxu0
    %v848 = vadd.f32 0.0, %v847
    %v849 = vpop.f32.mrf.mxu0
    %v850 = vadd.f32 0.0, %v849
    %v851 = vpop.f32.mrf.mxu0
    %v852 = vadd.f32 0.0, %v851
    %853 = vdwg.mxu0
    %854 = vmatprep.subr.bf16.mxu0 0
    %855 = vmatpush1.bf16.msra.mxu0 0
    %856 = vmatprep.subr.bf16.mxu0 0
    %857 = vmatpush1.bf16.msra.mxu0 0
    %858 = vmatprep.subr.bf16.mxu0 0
    %859 = vmatpush1.bf16.msra.mxu0 0
    %860 = vmatprep.subr.bf16.mxu0 0
    %861 = vmatpush1.bf16.msra.mxu0 0
    %862 = vmatprep.subr.bf16.mxu0 0
    %863 = vmatpush1.bf16.msra.mxu0 0
    %864 = vmatprep.subr.bf16.mxu0 0
    %865 = vmatpush1.bf16.msra.mxu0 0
    %866 = vmatprep.subr.bf16.mxu0 0
    %867 = vmatpush1.bf16.msra.mxu0 0
    %868 = vmatprep.subr.bf16.mxu0 0
    %869 = vmatpush1.bf16.msra.mxu0 %v766
    %870 = vmatprep.subr.bf16.mxu0 0
    %871 = vmatpush2.bf16.msra.mxu0 0
    %872 = vmatprep.subr.bf16.mxu0 0
    %873 = vmatpush2.bf16.msra.mxu0 0
    %874 = vmatprep.subr.bf16.mxu0 0
    %875 = vmatpush2.bf16.msra.mxu0 0
    %876 = vmatprep.subr.bf16.mxu0 0
    %877 = vmatpush2.bf16.msra.mxu0 0
    %878 = vmatprep.subr.bf16.mxu0 0
    %879 = vmatpush2.bf16.msra.mxu0 0
    %880 = vmatprep.subr.bf16.mxu0 0
    %881 = vmatpush2.bf16.msra.mxu0 0
    %882 = vmatprep.subr.bf16.mxu0 0
    %883 = vmatpush2.bf16.msra.mxu0 0
    %884 = vmatprep.subr.bf16.mxu0 0
    %885 = vmatpush2.bf16.msra.mxu0 0
    %886 = vmatprep.mubr.bf16.mxu0 0
    %887 = vmatmul.mubr.bf16.gmra.mxu0 %v751
    %v888 = vpop.f32.mrf.mxu0
    %v889 = vadd.f32 0.0, %v888
    %v890 = vpop.f32.mrf.mxu0
    %v891 = vpop.f32.mrf.mxu0
    %v892 = vadd.f32 0.0, %v891
    %v893 = vpop.f32.mrf.mxu0
    %894 = vdwg.mxu0
    %v895 = vadd.f32 %v717, %v803
    %v896 = vadd.f32 %v718, %v805
    %v897 = vadd.f32 %v719, %v846
    %v898 = vadd.f32 %v720, %v848
    %v899 = vadd.f32 %v721, %v889
    %v900 = vadd.f32 %v722, %v807
    %v901 = vadd.f32 %v723, %v809
    %v902 = vadd.f32 %v724, %v850
    %v903 = vadd.f32 %v725, %v852
    %v904 = vadd.f32 %v726, %v892
    %s905 = scalar_lea.vmem %s1, 40
    %v906 = vld [vmem:[%s905] sm:$0xf]
    %v907 = vld [vmem:[%s905 + $0x4] sm:$0xf]
    %v910 = vunpack.c.l.b16 %v906
    %v911 = vunpack.c.l.b16 %v907
    %v912 = vpack.c.b16 %v911, %v910
    %913 = vrot.lane.b32.xlu0 %v39, 110
    %v914 = vpop.permute.xlu0 %913
    %915 = vrot.lane.b32.xlu0 %v40, 110
    %v916 = vpop.permute.xlu0 %915
    %917 = vrot.lane.b32.xlu0 %v41, 110
    %v918 = vpop.permute.xlu0 %917
    %919 = vrot.lane.b32.xlu0 %v42, 110
    %v920 = vpop.permute.xlu0 %919
    %921 = vrot.lane.b32.xlu0 %v43, 110
    %v922 = vpop.permute.xlu0 %921
    %vm923 = vcmask 900096
    %v924 = vsel %vm923, %v914, %v916
    %v925 = vsel %vm923, %v916, %v918
    %v926 = vsel %vm923, %v918, %v920
    %v927 = vsel %vm923, %v920, %v922
    %v929 = vsel %vm74, %v912, 0
    %v932 = vsel %vm78, %v924, 0
    %v935 = vsel %vm78, %v925, 0
    %v938 = vsel %vm78, %v926, 0
    %v941 = vsel %vm78, %v927, 0
    %v944 = vsel %vm78, %v922, 0
    %946 = vmatprep.subr.bf16.mxu0 0
    %947 = vmatpush1.bf16.msra.mxu0 0
    %948 = vmatprep.subr.bf16.mxu0 0
    %949 = vmatpush1.bf16.msra.mxu0 0
    %950 = vmatprep.subr.bf16.mxu0 0
    %951 = vmatpush1.bf16.msra.mxu0 0
    %952 = vmatprep.subr.bf16.mxu0 0
    %953 = vmatpush1.bf16.msra.mxu0 0
    %954 = vmatprep.subr.bf16.mxu0 0
    %955 = vmatpush1.bf16.msra.mxu0 0
    %956 = vmatprep.subr.bf16.mxu0 0
    %957 = vmatpush1.bf16.msra.mxu0 0
    %958 = vmatprep.subr.bf16.mxu0 0
    %959 = vmatpush1.bf16.msra.mxu0 0
    %960 = vmatprep.subr.bf16.mxu0 %v935
    %961 = vmatpush1.bf16.msra.mxu0 %v932
    %962 = vmatprep.subr.bf16.mxu0 0
    %963 = vmatpush2.bf16.msra.mxu0 0
    %964 = vmatprep.subr.bf16.mxu0 0
    %965 = vmatpush2.bf16.msra.mxu0 0
    %966 = vmatprep.subr.bf16.mxu0 0
    %967 = vmatpush2.bf16.msra.mxu0 0
    %968 = vmatprep.subr.bf16.mxu0 0
    %969 = vmatpush2.bf16.msra.mxu0 0
    %970 = vmatprep.subr.bf16.mxu0 0
    %971 = vmatpush2.bf16.msra.mxu0 0
    %972 = vmatprep.subr.bf16.mxu0 0
    %973 = vmatpush2.bf16.msra.mxu0 0
    %974 = vmatprep.subr.bf16.mxu0 0
    %975 = vmatpush2.bf16.msra.mxu0 0
    %976 = vmatprep.subr.bf16.mxu0 0
    %977 = vmatpush2.bf16.msra.mxu0 0
    %978 = vmatprep.mubr.bf16.mxu0 0
    %979 = vmatmul.mubr.bf16.gmra.mxu0 %v929
    %v980 = vpop.f32.mrf.mxu0
    %v981 = vadd.f32 0.0, %v980
    %v982 = vpop.f32.mrf.mxu0
    %v983 = vadd.f32 0.0, %v982
    %v984 = vpop.f32.mrf.mxu0
    %v985 = vadd.f32 0.0, %v984
    %v986 = vpop.f32.mrf.mxu0
    %v987 = vadd.f32 0.0, %v986
    %988 = vdwg.mxu0
    %989 = vmatprep.subr.bf16.mxu0 0
    %990 = vmatpush1.bf16.msra.mxu0 0
    %991 = vmatprep.subr.bf16.mxu0 0
    %992 = vmatpush1.bf16.msra.mxu0 0
    %993 = vmatprep.subr.bf16.mxu0 0
    %994 = vmatpush1.bf16.msra.mxu0 0
    %995 = vmatprep.subr.bf16.mxu0 0
    %996 = vmatpush1.bf16.msra.mxu0 0
    %997 = vmatprep.subr.bf16.mxu0 0
    %998 = vmatpush1.bf16.msra.mxu0 0
    %999 = vmatprep.subr.bf16.mxu0 0
    %1000 = vmatpush1.bf16.msra.mxu0 0
    %1001 = vmatprep.subr.bf16.mxu0 0
    %1002 = vmatpush1.bf16.msra.mxu0 0
    %1003 = vmatprep.subr.bf16.mxu0 %v941
    %1004 = vmatpush1.bf16.msra.mxu0 %v938
    %1005 = vmatprep.subr.bf16.mxu0 0
    %1006 = vmatpush2.bf16.msra.mxu0 0
    %1007 = vmatprep.subr.bf16.mxu0 0
    %1008 = vmatpush2.bf16.msra.mxu0 0
    %1009 = vmatprep.subr.bf16.mxu0 0
    %1010 = vmatpush2.bf16.msra.mxu0 0
    %1011 = vmatprep.subr.bf16.mxu0 0
    %1012 = vmatpush2.bf16.msra.mxu0 0
    %1013 = vmatprep.subr.bf16.mxu0 0
    %1014 = vmatpush2.bf16.msra.mxu0 0
    %1015 = vmatprep.subr.bf16.mxu0 0
    %1016 = vmatpush2.bf16.msra.mxu0 0
    %1017 = vmatprep.subr.bf16.mxu0 0
    %1018 = vmatpush2.bf16.msra.mxu0 0
    %1019 = vmatprep.subr.bf16.mxu0 0
    %1020 = vmatpush2.bf16.msra.mxu0 0
    %1021 = vmatprep.mubr.bf16.mxu0 0
    %1022 = vmatmul.mubr.bf16.gmra.mxu0 %v929
    %v1023 = vpop.f32.mrf.mxu0
    %v1024 = vadd.f32 0.0, %v1023
    %v1025 = vpop.f32.mrf.mxu0
    %v1026 = vadd.f32 0.0, %v1025
    %v1027 = vpop.f32.mrf.mxu0
    %v1028 = vadd.f32 0.0, %v1027
    %v1029 = vpop.f32.mrf.mxu0
    %v1030 = vadd.f32 0.0, %v1029
    %1031 = vdwg.mxu0
    %1032 = vmatprep.subr.bf16.mxu0 0
    %1033 = vmatpush1.bf16.msra.mxu0 0
    %1034 = vmatprep.subr.bf16.mxu0 0
    %1035 = vmatpush1.bf16.msra.mxu0 0
    %1036 = vmatprep.subr.bf16.mxu0 0
    %1037 = vmatpush1.bf16.msra.mxu0 0
    %1038 = vmatprep.subr.bf16.mxu0 0
    %1039 = vmatpush1.bf16.msra.mxu0 0
    %1040 = vmatprep.subr.bf16.mxu0 0
    %1041 = vmatpush1.bf16.msra.mxu0 0
    %1042 = vmatprep.subr.bf16.mxu0 0
    %1043 = vmatpush1.bf16.msra.mxu0 0
    %1044 = vmatprep.subr.bf16.mxu0 0
    %1045 = vmatpush1.bf16.msra.mxu0 0
    %1046 = vmatprep.subr.bf16.mxu0 0
    %1047 = vmatpush1.bf16.msra.mxu0 %v944
    %1048 = vmatprep.subr.bf16.mxu0 0
    %1049 = vmatpush2.bf16.msra.mxu0 0
    %1050 = vmatprep.subr.bf16.mxu0 0
    %1051 = vmatpush2.bf16.msra.mxu0 0
    %1052 = vmatprep.subr.bf16.mxu0 0
    %1053 = vmatpush2.bf16.msra.mxu0 0
    %1054 = vmatprep.subr.bf16.mxu0 0
    %1055 = vmatpush2.bf16.msra.mxu0 0
    %1056 = vmatprep.subr.bf16.mxu0 0
    %1057 = vmatpush2.bf16.msra.mxu0 0
    %1058 = vmatprep.subr.bf16.mxu0 0
    %1059 = vmatpush2.bf16.msra.mxu0 0
    %1060 = vmatprep.subr.bf16.mxu0 0
    %1061 = vmatpush2.bf16.msra.mxu0 0
    %1062 = vmatprep.subr.bf16.mxu0 0
    %1063 = vmatpush2.bf16.msra.mxu0 0
    %1064 = vmatprep.mubr.bf16.mxu0 0
    %1065 = vmatmul.mubr.bf16.gmra.mxu0 %v929
    %v1066 = vpop.f32.mrf.mxu0
    %v1067 = vadd.f32 0.0, %v1066
    %v1068 = vpop.f32.mrf.mxu0
    %v1069 = vpop.f32.mrf.mxu0
    %v1070 = vadd.f32 0.0, %v1069
    %v1071 = vpop.f32.mrf.mxu0
    %1072 = vdwg.mxu0
    %v1073 = vadd.f32 %v895, %v981
    %v1074 = vadd.f32 %v896, %v983
    %v1075 = vadd.f32 %v897, %v1024
    %v1076 = vadd.f32 %v898, %v1026
    %v1077 = vadd.f32 %v899, %v1067
    %v1078 = vadd.f32 %v900, %v985
    %v1079 = vadd.f32 %v901, %v987
    %v1080 = vadd.f32 %v902, %v1028
    %v1081 = vadd.f32 %v903, %v1030
    %v1082 = vadd.f32 %v904, %v1070
    %s1083 = scalar_lea.vmem %s1, 48
    %v1084 = vld [vmem:[%s1083] sm:$0xf]
    %v1085 = vld [vmem:[%s1083 + $0x4] sm:$0xf]
    %v1088 = vunpack.c.l.b16 %v1084
    %v1089 = vunpack.c.l.b16 %v1085
    %v1090 = vpack.c.b16 %v1089, %v1088
    %1091 = vrot.lane.b32.xlu0 %v39, 96
    %v1092 = vpop.permute.xlu0 %1091
    %1093 = vrot.lane.b32.xlu0 %v40, 96
    %v1094 = vpop.permute.xlu0 %1093
    %1095 = vrot.lane.b32.xlu0 %v41, 96
    %v1096 = vpop.permute.xlu0 %1095
    %1097 = vrot.lane.b32.xlu0 %v42, 96
    %v1098 = vpop.permute.xlu0 %1097
    %1099 = vrot.lane.b32.xlu0 %v43, 96
    %v1100 = vpop.permute.xlu0 %1099
    %vm1101 = vcmask 785408
    %v1102 = vsel %vm1101, %v1092, %v1094
    %v1103 = vsel %vm1101, %v1094, %v1096
    %v1104 = vsel %vm1101, %v1096, %v1098
    %v1105 = vsel %vm1101, %v1098, %v1100
    %v1107 = vsel %vm74, %v1090, 0
    %v1110 = vsel %vm78, %v1102, 0
    %v1113 = vsel %vm78, %v1103, 0
    %v1116 = vsel %vm78, %v1104, 0
    %v1119 = vsel %vm78, %v1105, 0
    %v1122 = vsel %vm78, %v1100, 0
    %1124 = vmatprep.subr.bf16.mxu0 0
    %1125 = vmatpush1.bf16.msra.mxu0 0
    %1126 = vmatprep.subr.bf16.mxu0 0
    %1127 = vmatpush1.bf16.msra.mxu0 0
    %1128 = vmatprep.subr.bf16.mxu0 0
    %1129 = vmatpush1.bf16.msra.mxu0 0
    %1130 = vmatprep.subr.bf16.mxu0 0
    %1131 = vmatpush1.bf16.msra.mxu0 0
    %1132 = vmatprep.subr.bf16.mxu0 0
    %1133 = vmatpush1.bf16.msra.mxu0 0
    %1134 = vmatprep.subr.bf16.mxu0 0
    %1135 = vmatpush1.bf16.msra.mxu0 0
    %1136 = vmatprep.subr.bf16.mxu0 0
    %1137 = vmatpush1.bf16.msra.mxu0 0
    %1138 = vmatprep.subr.bf16.mxu0 %v1113
    %1139 = vmatpush1.bf16.msra.mxu0 %v1110
    %1140 = vmatprep.subr.bf16.mxu0 0
    %1141 = vmatpush2.bf16.msra.mxu0 0
    %1142 = vmatprep.subr.bf16.mxu0 0
    %1143 = vmatpush2.bf16.msra.mxu0 0
    %1144 = vmatprep.subr.bf16.mxu0 0
    %1145 = vmatpush2.bf16.msra.mxu0 0
    %1146 = vmatprep.subr.bf16.mxu0 0
    %1147 = vmatpush2.bf16.msra.mxu0 0
    %1148 = vmatprep.subr.bf16.mxu0 0
    %1149 = vmatpush2.bf16.msra.mxu0 0
    %1150 = vmatprep.subr.bf16.mxu0 0
    %1151 = vmatpush2.bf16.msra.mxu0 0
    %1152 = vmatprep.subr.bf16.mxu0 0
    %1153 = vmatpush2.bf16.msra.mxu0 0
    %1154 = vmatprep.subr.bf16.mxu0 0
    %1155 = vmatpush2.bf16.msra.mxu0 0
    %1156 = vmatprep.mubr.bf16.mxu0 0
    %1157 = vmatmul.mubr.bf16.gmra.mxu0 %v1107
    %v1158 = vpop.f32.mrf.mxu0
    %v1159 = vadd.f32 0.0, %v1158
    %v1160 = vpop.f32.mrf.mxu0
    %v1161 = vadd.f32 0.0, %v1160
    %v1162 = vpop.f32.mrf.mxu0
    %v1163 = vadd.f32 0.0, %v1162
    %v1164 = vpop.f32.mrf.mxu0
    %v1165 = vadd.f32 0.0, %v1164
    %1166 = vdwg.mxu0
    %1167 = vmatprep.subr.bf16.mxu0 0
    %1168 = vmatpush1.bf16.msra.mxu0 0
    %1169 = vmatprep.subr.bf16.mxu0 0
    %1170 = vmatpush1.bf16.msra.mxu0 0
    %1171 = vmatprep.subr.bf16.mxu0 0
    %1172 = vmatpush1.bf16.msra.mxu0 0
    %1173 = vmatprep.subr.bf16.mxu0 0
    %1174 = vmatpush1.bf16.msra.mxu0 0
    %1175 = vmatprep.subr.bf16.mxu0 0
    %1176 = vmatpush1.bf16.msra.mxu0 0
    %1177 = vmatprep.subr.bf16.mxu0 0
    %1178 = vmatpush1.bf16.msra.mxu0 0
    %1179 = vmatprep.subr.bf16.mxu0 0
    %1180 = vmatpush1.bf16.msra.mxu0 0
    %1181 = vmatprep.subr.bf16.mxu0 %v1119
    %1182 = vmatpush1.bf16.msra.mxu0 %v1116
    %1183 = vmatprep.subr.bf16.mxu0 0
    %1184 = vmatpush2.bf16.msra.mxu0 0
    %1185 = vmatprep.subr.bf16.mxu0 0
    %1186 = vmatpush2.bf16.msra.mxu0 0
    %1187 = vmatprep.subr.bf16.mxu0 0
    %1188 = vmatpush2.bf16.msra.mxu0 0
    %1189 = vmatprep.subr.bf16.mxu0 0
    %1190 = vmatpush2.bf16.msra.mxu0 0
    %1191 = vmatprep.subr.bf16.mxu0 0
    %1192 = vmatpush2.bf16.msra.mxu0 0
    %1193 = vmatprep.subr.bf16.mxu0 0
    %1194 = vmatpush2.bf16.msra.mxu0 0
    %1195 = vmatprep.subr.bf16.mxu0 0
    %1196 = vmatpush2.bf16.msra.mxu0 0
    %1197 = vmatprep.subr.bf16.mxu0 0
    %1198 = vmatpush2.bf16.msra.mxu0 0
    %1199 = vmatprep.mubr.bf16.mxu0 0
    %1200 = vmatmul.mubr.bf16.gmra.mxu0 %v1107
    %v1201 = vpop.f32.mrf.mxu0
    %v1202 = vadd.f32 0.0, %v1201
    %v1203 = vpop.f32.mrf.mxu0
    %v1204 = vadd.f32 0.0, %v1203
    %v1205 = vpop.f32.mrf.mxu0
    %v1206 = vadd.f32 0.0, %v1205
    %v1207 = vpop.f32.mrf.mxu0
    %v1208 = vadd.f32 0.0, %v1207
    %1209 = vdwg.mxu0
    %1210 = vmatprep.subr.bf16.mxu0 0
    %1211 = vmatpush1.bf16.msra.mxu0 0
    %1212 = vmatprep.subr.bf16.mxu0 0
    %1213 = vmatpush1.bf16.msra.mxu0 0
    %1214 = vmatprep.subr.bf16.mxu0 0
    %1215 = vmatpush1.bf16.msra.mxu0 0
    %1216 = vmatprep.subr.bf16.mxu0 0
    %1217 = vmatpush1.bf16.msra.mxu0 0
    %1218 = vmatprep.subr.bf16.mxu0 0
    %1219 = vmatpush1.bf16.msra.mxu0 0
    %1220 = vmatprep.subr.bf16.mxu0 0
    %1221 = vmatpush1.bf16.msra.mxu0 0
    %1222 = vmatprep.subr.bf16.mxu0 0
    %1223 = vmatpush1.bf16.msra.mxu0 0
    %1224 = vmatprep.subr.bf16.mxu0 0
    %1225 = vmatpush1.bf16.msra.mxu0 %v1122
    %1226 = vmatprep.subr.bf16.mxu0 0
    %1227 = vmatpush2.bf16.msra.mxu0 0
    %1228 = vmatprep.subr.bf16.mxu0 0
    %1229 = vmatpush2.bf16.msra.mxu0 0
    %1230 = vmatprep.subr.bf16.mxu0 0
    %1231 = vmatpush2.bf16.msra.mxu0 0
    %1232 = vmatprep.subr.bf16.mxu0 0
    %1233 = vmatpush2.bf16.msra.mxu0 0
    %1234 = vmatprep.subr.bf16.mxu0 0
    %1235 = vmatpush2.bf16.msra.mxu0 0
    %1236 = vmatprep.subr.bf16.mxu0 0
    %1237 = vmatpush2.bf16.msra.mxu0 0
    %1238 = vmatprep.subr.bf16.mxu0 0
    %1239 = vmatpush2.bf16.msra.mxu0 0
    %1240 = vmatprep.subr.bf16.mxu0 0
    %1241 = vmatpush2.bf16.msra.mxu0 0
    %1242 = vmatprep.mubr.bf16.mxu0 0
    %1243 = vmatmul.mubr.bf16.gmra.mxu0 %v1107
    %v1244 = vpop.f32.mrf.mxu0
    %v1245 = vadd.f32 0.0, %v1244
    %v1246 = vpop.f32.mrf.mxu0
    %v1247 = vpop.f32.mrf.mxu0
    %v1248 = vadd.f32 0.0, %v1247
    %v1249 = vpop.f32.mrf.mxu0
    %1250 = vdwg.mxu0
    %v1251 = vadd.f32 %v1073, %v1159
    %v1252 = vadd.f32 %v1074, %v1161
    %v1253 = vadd.f32 %v1075, %v1202
    %v1254 = vadd.f32 %v1076, %v1204
    %v1255 = vadd.f32 %v1077, %v1245
    %v1256 = vadd.f32 %v1078, %v1163
    %v1257 = vadd.f32 %v1079, %v1165
    %v1258 = vadd.f32 %v1080, %v1206
    %v1259 = vadd.f32 %v1081, %v1208
    %v1260 = vadd.f32 %v1082, %v1248
    %s1261 = scalar_lea.vmem %s1, 56
    %v1262 = vld [vmem:[%s1261] sm:$0xf]
    %v1263 = vld [vmem:[%s1261 + $0x4] sm:$0xf]
    %v1266 = vunpack.c.l.b16 %v1262
    %v1267 = vunpack.c.l.b16 %v1263
    %v1268 = vpack.c.b16 %v1267, %v1266
    %1269 = vrot.lane.b32.xlu0 %v39, 95
    %v1270 = vpop.permute.xlu0 %1269
    %1271 = vrot.lane.b32.xlu0 %v40, 95
    %v1272 = vpop.permute.xlu0 %1271
    %1273 = vrot.lane.b32.xlu0 %v41, 95
    %v1274 = vpop.permute.xlu0 %1273
    %1275 = vrot.lane.b32.xlu0 %v42, 95
    %v1276 = vpop.permute.xlu0 %1275
    %1277 = vrot.lane.b32.xlu0 %v43, 95
    %v1278 = vpop.permute.xlu0 %1277
    %vm1279 = vcmask 777216
    %v1280 = vsel %vm1279, %v1270, %v1272
    %v1281 = vsel %vm1279, %v1272, %v1274
    %v1282 = vsel %vm1279, %v1274, %v1276
    %v1283 = vsel %vm1279, %v1276, %v1278
    %v1285 = vsel %vm74, %v1268, 0
    %v1288 = vsel %vm78, %v1280, 0
    %v1291 = vsel %vm78, %v1281, 0
    %v1294 = vsel %vm78, %v1282, 0
    %v1297 = vsel %vm78, %v1283, 0
    %v1300 = vsel %vm78, %v1278, 0
    %1302 = vmatprep.subr.bf16.mxu0 0
    %1303 = vmatpush1.bf16.msra.mxu0 0
    %1304 = vmatprep.subr.bf16.mxu0 0
    %1305 = vmatpush1.bf16.msra.mxu0 0
    %1306 = vmatprep.subr.bf16.mxu0 0
    %1307 = vmatpush1.bf16.msra.mxu0 0
    %1308 = vmatprep.subr.bf16.mxu0 0
    %1309 = vmatpush1.bf16.msra.mxu0 0
    %1310 = vmatprep.subr.bf16.mxu0 0
    %1311 = vmatpush1.bf16.msra.mxu0 0
    %1312 = vmatprep.subr.bf16.mxu0 0
    %1313 = vmatpush1.bf16.msra.mxu0 0
    %1314 = vmatprep.subr.bf16.mxu0 0
    %1315 = vmatpush1.bf16.msra.mxu0 0
    %1316 = vmatprep.subr.bf16.mxu0 %v1291
    %1317 = vmatpush1.bf16.msra.mxu0 %v1288
    %1318 = vmatprep.subr.bf16.mxu0 0
    %1319 = vmatpush2.bf16.msra.mxu0 0
    %1320 = vmatprep.subr.bf16.mxu0 0
    %1321 = vmatpush2.bf16.msra.mxu0 0
    %1322 = vmatprep.subr.bf16.mxu0 0
    %1323 = vmatpush2.bf16.msra.mxu0 0
    %1324 = vmatprep.subr.bf16.mxu0 0
    %1325 = vmatpush2.bf16.msra.mxu0 0
    %1326 = vmatprep.subr.bf16.mxu0 0
    %1327 = vmatpush2.bf16.msra.mxu0 0
    %1328 = vmatprep.subr.bf16.mxu0 0
    %1329 = vmatpush2.bf16.msra.mxu0 0
    %1330 = vmatprep.subr.bf16.mxu0 0
    %1331 = vmatpush2.bf16.msra.mxu0 0
    %1332 = vmatprep.subr.bf16.mxu0 0
    %1333 = vmatpush2.bf16.msra.mxu0 0
    %1334 = vmatprep.mubr.bf16.mxu0 0
    %1335 = vmatmul.mubr.bf16.gmra.mxu0 %v1285
    %v1336 = vpop.f32.mrf.mxu0
    %v1337 = vadd.f32 0.0, %v1336
    %v1338 = vpop.f32.mrf.mxu0
    %v1339 = vadd.f32 0.0, %v1338
    %v1340 = vpop.f32.mrf.mxu0
    %v1341 = vadd.f32 0.0, %v1340
    %v1342 = vpop.f32.mrf.mxu0
    %v1343 = vadd.f32 0.0, %v1342
    %1344 = vdwg.mxu0
    %1345 = vmatprep.subr.bf16.mxu0 0
    %1346 = vmatpush1.bf16.msra.mxu0 0
    %1347 = vmatprep.subr.bf16.mxu0 0
    %1348 = vmatpush1.bf16.msra.mxu0 0
    %1349 = vmatprep.subr.bf16.mxu0 0
    %1350 = vmatpush1.bf16.msra.mxu0 0
    %1351 = vmatprep.subr.bf16.mxu0 0
    %1352 = vmatpush1.bf16.msra.mxu0 0
    %1353 = vmatprep.subr.bf16.mxu0 0
    %1354 = vmatpush1.bf16.msra.mxu0 0
    %1355 = vmatprep.subr.bf16.mxu0 0
    %1356 = vmatpush1.bf16.msra.mxu0 0
    %1357 = vmatprep.subr.bf16.mxu0 0
    %1358 = vmatpush1.bf16.msra.mxu0 0
    %1359 = vmatprep.subr.bf16.mxu0 %v1297
    %1360 = vmatpush1.bf16.msra.mxu0 %v1294
    %1361 = vmatprep.subr.bf16.mxu0 0
    %1362 = vmatpush2.bf16.msra.mxu0 0
    %1363 = vmatprep.subr.bf16.mxu0 0
    %1364 = vmatpush2.bf16.msra.mxu0 0
    %1365 = vmatprep.subr.bf16.mxu0 0
    %1366 = vmatpush2.bf16.msra.mxu0 0
    %1367 = vmatprep.subr.bf16.mxu0 0
    %1368 = vmatpush2.bf16.msra.mxu0 0
    %1369 = vmatprep.subr.bf16.mxu0 0
    %1370 = vmatpush2.bf16.msra.mxu0 0
    %1371 = vmatprep.subr.bf16.mxu0 0
    %1372 = vmatpush2.bf16.msra.mxu0 0
    %1373 = vmatprep.subr.bf16.mxu0 0
    %1374 = vmatpush2.bf16.msra.mxu0 0
    %1375 = vmatprep.subr.bf16.mxu0 0
    %1376 = vmatpush2.bf16.msra.mxu0 0
    %1377 = vmatprep.mubr.bf16.mxu0 0
    %1378 = vmatmul.mubr.bf16.gmra.mxu0 %v1285
    %v1379 = vpop.f32.mrf.mxu0
    %v1380 = vadd.f32 0.0, %v1379
    %v1381 = vpop.f32.mrf.mxu0
    %v1382 = vadd.f32 0.0, %v1381
    %v1383 = vpop.f32.mrf.mxu0
    %v1384 = vadd.f32 0.0, %v1383
    %v1385 = vpop.f32.mrf.mxu0
    %v1386 = vadd.f32 0.0, %v1385
    %1387 = vdwg.mxu0
    %1388 = vmatprep.subr.bf16.mxu0 0
    %1389 = vmatpush1.bf16.msra.mxu0 0
    %1390 = vmatprep.subr.bf16.mxu0 0
    %1391 = vmatpush1.bf16.msra.mxu0 0
    %1392 = vmatprep.subr.bf16.mxu0 0
    %1393 = vmatpush1.bf16.msra.mxu0 0
    %1394 = vmatprep.subr.bf16.mxu0 0
    %1395 = vmatpush1.bf16.msra.mxu0 0
    %1396 = vmatprep.subr.bf16.mxu0 0
    %1397 = vmatpush1.bf16.msra.mxu0 0
    %1398 = vmatprep.subr.bf16.mxu0 0
    %1399 = vmatpush1.bf16.msra.mxu0 0
    %1400 = vmatprep.subr.bf16.mxu0 0
    %1401 = vmatpush1.bf16.msra.mxu0 0
    %1402 = vmatprep.subr.bf16.mxu0 0
    %1403 = vmatpush1.bf16.msra.mxu0 %v1300
    %1404 = vmatprep.subr.bf16.mxu0 0
    %1405 = vmatpush2.bf16.msra.mxu0 0
    %1406 = vmatprep.subr.bf16.mxu0 0
    %1407 = vmatpush2.bf16.msra.mxu0 0
    %1408 = vmatprep.subr.bf16.mxu0 0
    %1409 = vmatpush2.bf16.msra.mxu0 0
    %1410 = vmatprep.subr.bf16.mxu0 0
    %1411 = vmatpush2.bf16.msra.mxu0 0
    %1412 = vmatprep.subr.bf16.mxu0 0
    %1413 = vmatpush2.bf16.msra.mxu0 0
    %1414 = vmatprep.subr.bf16.mxu0 0
    %1415 = vmatpush2.bf16.msra.mxu0 0
    %1416 = vmatprep.subr.bf16.mxu0 0
    %1417 = vmatpush2.bf16.msra.mxu0 0
    %1418 = vmatprep.subr.bf16.mxu0 0
    %1419 = vmatpush2.bf16.msra.mxu0 0
    %1420 = vmatprep.mubr.bf16.mxu0 0
    %1421 = vmatmul.mubr.bf16.gmra.mxu0 %v1285
    %v1422 = vpop.f32.mrf.mxu0
    %v1423 = vadd.f32 0.0, %v1422
    %v1424 = vpop.f32.mrf.mxu0
    %v1425 = vpop.f32.mrf.mxu0
    %v1426 = vadd.f32 0.0, %v1425
    %v1427 = vpop.f32.mrf.mxu0
    %1428 = vdwg.mxu0
    %v1429 = vadd.f32 %v1251, %v1337
    %v1430 = vadd.f32 %v1252, %v1339
    %v1431 = vadd.f32 %v1253, %v1380
    %v1432 = vadd.f32 %v1254, %v1382
    %v1433 = vadd.f32 %v1255, %v1423
    %v1434 = vadd.f32 %v1256, %v1341
    %v1435 = vadd.f32 %v1257, %v1343
    %v1436 = vadd.f32 %v1258, %v1384
    %v1437 = vadd.f32 %v1259, %v1386
    %v1438 = vadd.f32 %v1260, %v1426
    %s1439 = scalar_lea.vmem %s1, 64
    %v1440 = vld [vmem:[%s1439] sm:$0xf]
    %v1441 = vld [vmem:[%s1439 + $0x4] sm:$0xf]
    %v1444 = vunpack.c.l.b16 %v1440
    %v1445 = vunpack.c.l.b16 %v1441
    %v1446 = vpack.c.b16 %v1445, %v1444
    %1447 = vrot.lane.b32.xlu0 %v39, 94
    %v1448 = vpop.permute.xlu0 %1447
    %1449 = vrot.lane.b32.xlu0 %v40, 94
    %v1450 = vpop.permute.xlu0 %1449
    %1451 = vrot.lane.b32.xlu0 %v41, 94
    %v1452 = vpop.permute.xlu0 %1451
    %1453 = vrot.lane.b32.xlu0 %v42, 94
    %v1454 = vpop.permute.xlu0 %1453
    %1455 = vrot.lane.b32.xlu0 %v43, 94
    %v1456 = vpop.permute.xlu0 %1455
    %vm1457 = vcmask 769024
    %v1458 = vsel %vm1457, %v1448, %v1450
    %v1459 = vsel %vm1457, %v1450, %v1452
    %v1460 = vsel %vm1457, %v1452, %v1454
    %v1461 = vsel %vm1457, %v1454, %v1456
    %v1463 = vsel %vm74, %v1446, 0
    %v1466 = vsel %vm78, %v1458, 0
    %v1469 = vsel %vm78, %v1459, 0
    %v1472 = vsel %vm78, %v1460, 0
    %v1475 = vsel %vm78, %v1461, 0
    %v1478 = vsel %vm78, %v1456, 0
    %1480 = vmatprep.subr.bf16.mxu0 0
    %1481 = vmatpush1.bf16.msra.mxu0 0
    %1482 = vmatprep.subr.bf16.mxu0 0
    %1483 = vmatpush1.bf16.msra.mxu0 0
    %1484 = vmatprep.subr.bf16.mxu0 0
    %1485 = vmatpush1.bf16.msra.mxu0 0
    %1486 = vmatprep.subr.bf16.mxu0 0
    %1487 = vmatpush1.bf16.msra.mxu0 0
    %1488 = vmatprep.subr.bf16.mxu0 0
    %1489 = vmatpush1.bf16.msra.mxu0 0
    %1490 = vmatprep.subr.bf16.mxu0 0
    %1491 = vmatpush1.bf16.msra.mxu0 0
    %1492 = vmatprep.subr.bf16.mxu0 0
    %1493 = vmatpush1.bf16.msra.mxu0 0
    %1494 = vmatprep.subr.bf16.mxu0 %v1469
    %1495 = vmatpush1.bf16.msra.mxu0 %v1466
    %1496 = vmatprep.subr.bf16.mxu0 0
    %1497 = vmatpush2.bf16.msra.mxu0 0
    %1498 = vmatprep.subr.bf16.mxu0 0
    %1499 = vmatpush2.bf16.msra.mxu0 0
    %1500 = vmatprep.subr.bf16.mxu0 0
    %1501 = vmatpush2.bf16.msra.mxu0 0
    %1502 = vmatprep.subr.bf16.mxu0 0
    %1503 = vmatpush2.bf16.msra.mxu0 0
    %1504 = vmatprep.subr.bf16.mxu0 0
    %1505 = vmatpush2.bf16.msra.mxu0 0
    %1506 = vmatprep.subr.bf16.mxu0 0
    %1507 = vmatpush2.bf16.msra.mxu0 0
    %1508 = vmatprep.subr.bf16.mxu0 0
    %1509 = vmatpush2.bf16.msra.mxu0 0
    %1510 = vmatprep.subr.bf16.mxu0 0
    %1511 = vmatpush2.bf16.msra.mxu0 0
    %1512 = vmatprep.mubr.bf16.mxu0 0
    %1513 = vmatmul.mubr.bf16.gmra.mxu0 %v1463
    %v1514 = vpop.f32.mrf.mxu0
    %v1515 = vadd.f32 0.0, %v1514
    %v1516 = vpop.f32.mrf.mxu0
    %v1517 = vadd.f32 0.0, %v1516
    %v1518 = vpop.f32.mrf.mxu0
    %v1519 = vadd.f32 0.0, %v1518
    %v1520 = vpop.f32.mrf.mxu0
    %v1521 = vadd.f32 0.0, %v1520
    %1522 = vdwg.mxu0
    %1523 = vmatprep.subr.bf16.mxu0 0
    %1524 = vmatpush1.bf16.msra.mxu0 0
    %1525 = vmatprep.subr.bf16.mxu0 0
    %1526 = vmatpush1.bf16.msra.mxu0 0
    %1527 = vmatprep.subr.bf16.mxu0 0
    %1528 = vmatpush1.bf16.msra.mxu0 0
    %1529 = vmatprep.subr.bf16.mxu0 0
    %1530 = vmatpush1.bf16.msra.mxu0 0
    %1531 = vmatprep.subr.bf16.mxu0 0
    %1532 = vmatpush1.bf16.msra.mxu0 0
    %1533 = vmatprep.subr.bf16.mxu0 0
    %1534 = vmatpush1.bf16.msra.mxu0 0
    %1535 = vmatprep.subr.bf16.mxu0 0
    %1536 = vmatpush1.bf16.msra.mxu0 0
    %1537 = vmatprep.subr.bf16.mxu0 %v1475
    %1538 = vmatpush1.bf16.msra.mxu0 %v1472
    %1539 = vmatprep.subr.bf16.mxu0 0
    %1540 = vmatpush2.bf16.msra.mxu0 0
    %1541 = vmatprep.subr.bf16.mxu0 0
    %1542 = vmatpush2.bf16.msra.mxu0 0
    %1543 = vmatprep.subr.bf16.mxu0 0
    %1544 = vmatpush2.bf16.msra.mxu0 0
    %1545 = vmatprep.subr.bf16.mxu0 0
    %1546 = vmatpush2.bf16.msra.mxu0 0
    %1547 = vmatprep.subr.bf16.mxu0 0
    %1548 = vmatpush2.bf16.msra.mxu0 0
    %1549 = vmatprep.subr.bf16.mxu0 0
    %1550 = vmatpush2.bf16.msra.mxu0 0
    %1551 = vmatprep.subr.bf16.mxu0 0
    %1552 = vmatpush2.bf16.msra.mxu0 0
    %1553 = vmatprep.subr.bf16.mxu0 0
    %1554 = vmatpush2.bf16.msra.mxu0 0
    %1555 = vmatprep.mubr.bf16.mxu0 0
    %1556 = vmatmul.mubr.bf16.gmra.mxu0 %v1463
    %v1557 = vpop.f32.mrf.mxu0
    %v1558 = vadd.f32 0.0, %v1557
    %v1559 = vpop.f32.mrf.mxu0
    %v1560 = vadd.f32 0.0, %v1559
    %v1561 = vpop.f32.mrf.mxu0
    %v1562 = vadd.f32 0.0, %v1561
    %v1563 = vpop.f32.mrf.mxu0
    %v1564 = vadd.f32 0.0, %v1563
    %1565 = vdwg.mxu0
    %1566 = vmatprep.subr.bf16.mxu0 0
    %1567 = vmatpush1.bf16.msra.mxu0 0
    %1568 = vmatprep.subr.bf16.mxu0 0
    %1569 = vmatpush1.bf16.msra.mxu0 0
    %1570 = vmatprep.subr.bf16.mxu0 0
    %1571 = vmatpush1.bf16.msra.mxu0 0
    %1572 = vmatprep.subr.bf16.mxu0 0
    %1573 = vmatpush1.bf16.msra.mxu0 0
    %1574 = vmatprep.subr.bf16.mxu0 0
    %1575 = vmatpush1.bf16.msra.mxu0 0
    %1576 = vmatprep.subr.bf16.mxu0 0
    %1577 = vmatpush1.bf16.msra.mxu0 0
    %1578 = vmatprep.subr.bf16.mxu0 0
    %1579 = vmatpush1.bf16.msra.mxu0 0
    %1580 = vmatprep.subr.bf16.mxu0 0
    %1581 = vmatpush1.bf16.msra.mxu0 %v1478
    %1582 = vmatprep.subr.bf16.mxu0 0
    %1583 = vmatpush2.bf16.msra.mxu0 0
    %1584 = vmatprep.subr.bf16.mxu0 0
    %1585 = vmatpush2.bf16.msra.mxu0 0
    %1586 = vmatprep.subr.bf16.mxu0 0
    %1587 = vmatpush2.bf16.msra.mxu0 0
    %1588 = vmatprep.subr.bf16.mxu0 0
    %1589 = vmatpush2.bf16.msra.mxu0 0
    %1590 = vmatprep.subr.bf16.mxu0 0
    %1591 = vmatpush2.bf16.msra.mxu0 0
    %1592 = vmatprep.subr.bf16.mxu0 0
    %1593 = vmatpush2.bf16.msra.mxu0 0
    %1594 = vmatprep.subr.bf16.mxu0 0
    %1595 = vmatpush2.bf16.msra.mxu0 0
    %1596 = vmatprep.subr.bf16.mxu0 0
    %1597 = vmatpush2.bf16.msra.mxu0 0
    %1598 = vmatprep.mubr.bf16.mxu0 0
    %1599 = vmatmul.mubr.bf16.gmra.mxu0 %v1463
    %v1600 = vpop.f32.mrf.mxu0
    %v1601 = vadd.f32 0.0, %v1600
    %v1602 = vpop.f32.mrf.mxu0
    %v1603 = vpop.f32.mrf.mxu0
    %v1604 = vadd.f32 0.0, %v1603
    %v1605 = vpop.f32.mrf.mxu0
    %1606 = vdwg.mxu0
    %v1607 = vadd.f32 %v1429, %v1515
    %v1608 = vadd.f32 %v1430, %v1517
    %v1609 = vadd.f32 %v1431, %v1558
    %v1610 = vadd.f32 %v1432, %v1560
    %v1611 = vadd.f32 %v1433, %v1601
    %v1612 = vadd.f32 %v1434, %v1519
    %v1613 = vadd.f32 %v1435, %v1521
    %v1614 = vadd.f32 %v1436, %v1562
    %v1615 = vadd.f32 %v1437, %v1564
    %v1616 = vadd.f32 %v1438, %v1604
    %v1617 = vld [vmem:[%s2] sm:$0xff]
    %v1618 = vld [vmem:[%s2 + $0x8] sm:$0xff]
    %1620 = vset.pattern.permute.xlu0 0
    %1621 = vperm.xlu0 %1620, %v1617
    %v1622 = vpop.permute.xlu0 %1621
    %1625 = vset.pattern.permute.xlu0 0
    %1626 = vperm.xlu0 %1625, %v1618
    %v1627 = vpop.permute.xlu0 %1626
    %v1629 = vadd.f32 %v1607, %v1622
    %v1630 = vadd.f32 %v1608, %v1622
    %v1631 = vadd.f32 %v1609, %v1622
    %v1632 = vadd.f32 %v1610, %v1622
    %v1633 = vadd.f32 %v1611, %v1622
    %v1634 = vadd.f32 %v1612, %v1627
    %v1635 = vadd.f32 %v1613, %v1627
    %v1636 = vadd.f32 %v1614, %v1627
    %v1637 = vadd.f32 %v1615, %v1627
    %v1638 = vadd.f32 %v1616, %v1627
    %v1639 = vmax.f32 %v1629, 0.0
    %v1640 = vmax.f32 %v1630, 0.0
    %v1641 = vmax.f32 %v1631, 0.0
    %v1642 = vmax.f32 %v1632, 0.0
    %v1643 = vmax.f32 %v1633, 0.0
    %v1644 = vmax.f32 %v1634, 0.0
    %v1645 = vmax.f32 %v1635, 0.0
    %v1646 = vmax.f32 %v1636, 0.0
    %v1647 = vmax.f32 %v1637, 0.0
    %v1648 = vmax.f32 %v1638, 0.0
    %v1649 = vpack.c.bf16 %v1644, %v1639
    %v1650 = vpack.c.bf16 %v1645, %v1640
    %v1651 = vpack.c.bf16 %v1646, %v1641
    %v1652 = vpack.c.bf16 %v1647, %v1642
    %v1653 = vpack.c.bf16 %v1648, %v1643
    %v1654 = vld [vmem:[%s3] sm:$0x3]
    %s1655 = scalar_lea.vmem %s3, 2
    %v1656 = vld [vmem:[%s1655] sm:$0x3]
    %1662 = vrot.lane.b32.xlu0 %v1649, 127
    %v1663 = vpop.permute.xlu0 %1662
    %1664 = vrot.lane.b32.xlu0 %v1650, 127
    %v1665 = vpop.permute.xlu0 %1664
    %1666 = vrot.lane.b32.xlu0 %v1651, 127
    %v1667 = vpop.permute.xlu0 %1666
    %1668 = vrot.lane.b32.xlu0 %v1652, 127
    %v1669 = vpop.permute.xlu0 %1668
    %1670 = vrot.lane.b32.xlu0 %v1653, 127
    %v1671 = vpop.permute.xlu0 %1670
    %v1672 = vsel %vm69, %v1663, %v1665
    %v1673 = vsel %vm69, %v1665, %v1667
    %v1674 = vsel %vm69, %v1667, %v1669
    %v1675 = vsel %vm69, %v1669, %v1671
    %vm1680 = vcmask 130048
    %v1682 = vsel %vm1680, %v1656, 0
    %1684 = vmatprep.subr.bf16.mxu0 0
    %1685 = vmatpush1.bf16.msra.mxu0 0
    %1686 = vmatprep.subr.bf16.mxu0 0
    %1687 = vmatpush1.bf16.msra.mxu0 0
    %1688 = vmatprep.subr.bf16.mxu0 0
    %1689 = vmatpush1.bf16.msra.mxu0 0
    %1690 = vmatprep.subr.bf16.mxu0 0
    %1691 = vmatpush1.bf16.msra.mxu0 0
    %1692 = vmatprep.subr.bf16.mxu0 0
    %1693 = vmatpush1.bf16.msra.mxu0 0
    %1694 = vmatprep.subr.bf16.mxu0 0
    %1695 = vmatpush1.bf16.msra.mxu0 0
    %1696 = vmatprep.subr.bf16.mxu0 0
    %1697 = vmatpush1.bf16.msra.mxu0 0
    %1698 = vmatprep.subr.bf16.mxu0 %v1673
    %1699 = vmatpush1.bf16.msra.mxu0 %v1672
    %1700 = vmatprep.subr.bf16.mxu0 0
    %1701 = vmatpush2.bf16.msra.mxu0 0
    %1702 = vmatprep.subr.bf16.mxu0 0
    %1703 = vmatpush2.bf16.msra.mxu0 0
    %1704 = vmatprep.subr.bf16.mxu0 0
    %1705 = vmatpush2.bf16.msra.mxu0 0
    %1706 = vmatprep.subr.bf16.mxu0 0
    %1707 = vmatpush2.bf16.msra.mxu0 0
    %1708 = vmatprep.subr.bf16.mxu0 0
    %1709 = vmatpush2.bf16.msra.mxu0 0
    %1710 = vmatprep.subr.bf16.mxu0 0
    %1711 = vmatpush2.bf16.msra.mxu0 0
    %1712 = vmatprep.subr.bf16.mxu0 0
    %1713 = vmatpush2.bf16.msra.mxu0 0
    %1714 = vmatprep.subr.bf16.mxu0 0
    %1715 = vmatpush2.bf16.msra.mxu0 0
    %1716 = vmatprep.mubr.bf16.mxu0 0
    %1717 = vmatmul.mubr.bf16.gmra.mxu0 %v1682
    %v1718 = vpop.f32.mrf.mxu0
    %v1719 = vadd.f32 0.0, %v1718
    %v1720 = vpop.f32.mrf.mxu0
    %v1721 = vadd.f32 0.0, %v1720
    %v1722 = vpop.f32.mrf.mxu0
    %v1723 = vpop.f32.mrf.mxu0
    %1724 = vdwg.mxu0
    %1725 = vmatprep.subr.bf16.mxu0 0
    %1726 = vmatpush1.bf16.msra.mxu0 0
    %1727 = vmatprep.subr.bf16.mxu0 0
    %1728 = vmatpush1.bf16.msra.mxu0 0
    %1729 = vmatprep.subr.bf16.mxu0 0
    %1730 = vmatpush1.bf16.msra.mxu0 0
    %1731 = vmatprep.subr.bf16.mxu0 0
    %1732 = vmatpush1.bf16.msra.mxu0 0
    %1733 = vmatprep.subr.bf16.mxu0 0
    %1734 = vmatpush1.bf16.msra.mxu0 0
    %1735 = vmatprep.subr.bf16.mxu0 0
    %1736 = vmatpush1.bf16.msra.mxu0 0
    %1737 = vmatprep.subr.bf16.mxu0 0
    %1738 = vmatpush1.bf16.msra.mxu0 0
    %1739 = vmatprep.subr.bf16.mxu0 %v1675
    %1740 = vmatpush1.bf16.msra.mxu0 %v1674
    %1741 = vmatprep.subr.bf16.mxu0 0
    %1742 = vmatpush2.bf16.msra.mxu0 0
    %1743 = vmatprep.subr.bf16.mxu0 0
    %1744 = vmatpush2.bf16.msra.mxu0 0
    %1745 = vmatprep.subr.bf16.mxu0 0
    %1746 = vmatpush2.bf16.msra.mxu0 0
    %1747 = vmatprep.subr.bf16.mxu0 0
    %1748 = vmatpush2.bf16.msra.mxu0 0
    %1749 = vmatprep.subr.bf16.mxu0 0
    %1750 = vmatpush2.bf16.msra.mxu0 0
    %1751 = vmatprep.subr.bf16.mxu0 0
    %1752 = vmatpush2.bf16.msra.mxu0 0
    %1753 = vmatprep.subr.bf16.mxu0 0
    %1754 = vmatpush2.bf16.msra.mxu0 0
    %1755 = vmatprep.subr.bf16.mxu0 0
    %1756 = vmatpush2.bf16.msra.mxu0 0
    %1757 = vmatprep.mubr.bf16.mxu0 0
    %1758 = vmatmul.mubr.bf16.gmra.mxu0 %v1682
    %v1759 = vpop.f32.mrf.mxu0
    %v1760 = vadd.f32 0.0, %v1759
    %v1761 = vpop.f32.mrf.mxu0
    %v1762 = vadd.f32 0.0, %v1761
    %v1763 = vpop.f32.mrf.mxu0
    %v1764 = vpop.f32.mrf.mxu0
    %1765 = vdwg.mxu0
    %v1767 = vsel %vm1680, %v1654, 0
    %1769 = vmatprep.subr.bf16.mxu0 0
    %1770 = vmatpush1.bf16.msra.mxu0 0
    %1771 = vmatprep.subr.bf16.mxu0 0
    %1772 = vmatpush1.bf16.msra.mxu0 0
    %1773 = vmatprep.subr.bf16.mxu0 0
    %1774 = vmatpush1.bf16.msra.mxu0 0
    %1775 = vmatprep.subr.bf16.mxu0 0
    %1776 = vmatpush1.bf16.msra.mxu0 0
    %1777 = vmatprep.subr.bf16.mxu0 0
    %1778 = vmatpush1.bf16.msra.mxu0 0
    %1779 = vmatprep.subr.bf16.mxu0 0
    %1780 = vmatpush1.bf16.msra.mxu0 0
    %1781 = vmatprep.subr.bf16.mxu0 0
    %1782 = vmatpush1.bf16.msra.mxu0 0
    %1783 = vmatprep.subr.bf16.mxu0 %v1650
    %1784 = vmatpush1.bf16.msra.mxu0 %v1649
    %1785 = vmatprep.subr.bf16.mxu0 0
    %1786 = vmatpush2.bf16.msra.mxu0 0
    %1787 = vmatprep.subr.bf16.mxu0 0
    %1788 = vmatpush2.bf16.msra.mxu0 0
    %1789 = vmatprep.subr.bf16.mxu0 0
    %1790 = vmatpush2.bf16.msra.mxu0 0
    %1791 = vmatprep.subr.bf16.mxu0 0
    %1792 = vmatpush2.bf16.msra.mxu0 0
    %1793 = vmatprep.subr.bf16.mxu0 0
    %1794 = vmatpush2.bf16.msra.mxu0 0
    %1795 = vmatprep.subr.bf16.mxu0 0
    %1796 = vmatpush2.bf16.msra.mxu0 0
    %1797 = vmatprep.subr.bf16.mxu0 0
    %1798 = vmatpush2.bf16.msra.mxu0 0
    %1799 = vmatprep.subr.bf16.mxu0 0
    %1800 = vmatpush2.bf16.msra.mxu0 0
    %1801 = vmatprep.mubr.bf16.mxu0 0
    %1802 = vmatmul.mubr.bf16.gmra.mxu0 %v1767
    %v1803 = vpop.f32.mrf.mxu0
    %v1804 = vadd.f32 %v1719, %v1803
    %v1805 = vpop.f32.mrf.mxu0
    %v1806 = vadd.f32 %v1721, %v1805
    %v1807 = vpop.f32.mrf.mxu0
    %v1808 = vpop.f32.mrf.mxu0
    %1809 = vdwg.mxu0
    %1810 = vmatprep.subr.bf16.mxu0 0
    %1811 = vmatpush1.bf16.msra.mxu0 0
    %1812 = vmatprep.subr.bf16.mxu0 0
    %1813 = vmatpush1.bf16.msra.mxu0 0
    %1814 = vmatprep.subr.bf16.mxu0 0
    %1815 = vmatpush1.bf16.msra.mxu0 0
    %1816 = vmatprep.subr.bf16.mxu0 0
    %1817 = vmatpush1.bf16.msra.mxu0 0
    %1818 = vmatprep.subr.bf16.mxu0 0
    %1819 = vmatpush1.bf16.msra.mxu0 0
    %1820 = vmatprep.subr.bf16.mxu0 0
    %1821 = vmatpush1.bf16.msra.mxu0 0
    %1822 = vmatprep.subr.bf16.mxu0 0
    %1823 = vmatpush1.bf16.msra.mxu0 0
    %1824 = vmatprep.subr.bf16.mxu0 %v1652
    %1825 = vmatpush1.bf16.msra.mxu0 %v1651
    %1826 = vmatprep.subr.bf16.mxu0 0
    %1827 = vmatpush2.bf16.msra.mxu0 0
    %1828 = vmatprep.subr.bf16.mxu0 0
    %1829 = vmatpush2.bf16.msra.mxu0 0
    %1830 = vmatprep.subr.bf16.mxu0 0
    %1831 = vmatpush2.bf16.msra.mxu0 0
    %1832 = vmatprep.subr.bf16.mxu0 0
    %1833 = vmatpush2.bf16.msra.mxu0 0
    %1834 = vmatprep.subr.bf16.mxu0 0
    %1835 = vmatpush2.bf16.msra.mxu0 0
    %1836 = vmatprep.subr.bf16.mxu0 0
    %1837 = vmatpush2.bf16.msra.mxu0 0
    %1838 = vmatprep.subr.bf16.mxu0 0
    %1839 = vmatpush2.bf16.msra.mxu0 0
    %1840 = vmatprep.subr.bf16.mxu0 0
    %1841 = vmatpush2.bf16.msra.mxu0 0
    %1842 = vmatprep.mubr.bf16.mxu0 0
    %1843 = vmatmul.mubr.bf16.gmra.mxu0 %v1767
    %v1844 = vpop.f32.mrf.mxu0
    %v1845 = vadd.f32 %v1760, %v1844
    %v1846 = vpop.f32.mrf.mxu0
    %v1847 = vadd.f32 %v1762, %v1846
    %v1848 = vpop.f32.mrf.mxu0
    %v1849 = vpop.f32.mrf.mxu0
    %1850 = vdwg.mxu0
    %s1851 = scalar_lea.vmem %s3, 4
    %v1852 = vld [vmem:[%s1851] sm:$0x3]
    %1853 = vrot.lane.b32.xlu0 %v1649, 126
    %v1854 = vpop.permute.xlu0 %1853
    %1855 = vrot.lane.b32.xlu0 %v1650, 126
    %v1856 = vpop.permute.xlu0 %1855
    %1857 = vrot.lane.b32.xlu0 %v1651, 126
    %v1858 = vpop.permute.xlu0 %1857
    %1859 = vrot.lane.b32.xlu0 %v1652, 126
    %v1860 = vpop.permute.xlu0 %1859
    %1861 = vrot.lane.b32.xlu0 %v1653, 126
    %v1862 = vpop.permute.xlu0 %1861
    %v1863 = vsel %vm389, %v1854, %v1856
    %v1864 = vsel %vm389, %v1856, %v1858
    %v1865 = vsel %vm389, %v1858, %v1860
    %v1866 = vsel %vm389, %v1860, %v1862
    %v1872 = vsel %vm1680, %v1852, 0
    %1874 = vmatprep.subr.bf16.mxu0 0
    %1875 = vmatpush1.bf16.msra.mxu0 0
    %1876 = vmatprep.subr.bf16.mxu0 0
    %1877 = vmatpush1.bf16.msra.mxu0 0
    %1878 = vmatprep.subr.bf16.mxu0 0
    %1879 = vmatpush1.bf16.msra.mxu0 0
    %1880 = vmatprep.subr.bf16.mxu0 0
    %1881 = vmatpush1.bf16.msra.mxu0 0
    %1882 = vmatprep.subr.bf16.mxu0 0
    %1883 = vmatpush1.bf16.msra.mxu0 0
    %1884 = vmatprep.subr.bf16.mxu0 0
    %1885 = vmatpush1.bf16.msra.mxu0 0
    %1886 = vmatprep.subr.bf16.mxu0 0
    %1887 = vmatpush1.bf16.msra.mxu0 0
    %1888 = vmatprep.subr.bf16.mxu0 %v1864
    %1889 = vmatpush1.bf16.msra.mxu0 %v1863
    %1890 = vmatprep.subr.bf16.mxu0 0
    %1891 = vmatpush2.bf16.msra.mxu0 0
    %1892 = vmatprep.subr.bf16.mxu0 0
    %1893 = vmatpush2.bf16.msra.mxu0 0
    %1894 = vmatprep.subr.bf16.mxu0 0
    %1895 = vmatpush2.bf16.msra.mxu0 0
    %1896 = vmatprep.subr.bf16.mxu0 0
    %1897 = vmatpush2.bf16.msra.mxu0 0
    %1898 = vmatprep.subr.bf16.mxu0 0
    %1899 = vmatpush2.bf16.msra.mxu0 0
    %1900 = vmatprep.subr.bf16.mxu0 0
    %1901 = vmatpush2.bf16.msra.mxu0 0
    %1902 = vmatprep.subr.bf16.mxu0 0
    %1903 = vmatpush2.bf16.msra.mxu0 0
    %1904 = vmatprep.subr.bf16.mxu0 0
    %1905 = vmatpush2.bf16.msra.mxu0 0
    %1906 = vmatprep.mubr.bf16.mxu0 0
    %1907 = vmatmul.mubr.bf16.gmra.mxu0 %v1872
    %v1908 = vpop.f32.mrf.mxu0
    %v1909 = vadd.f32 0.0, %v1908
    %v1910 = vpop.f32.mrf.mxu0
    %v1911 = vadd.f32 0.0, %v1910
    %v1912 = vpop.f32.mrf.mxu0
    %v1913 = vpop.f32.mrf.mxu0
    %1914 = vdwg.mxu0
    %1915 = vmatprep.subr.bf16.mxu0 0
    %1916 = vmatpush1.bf16.msra.mxu0 0
    %1917 = vmatprep.subr.bf16.mxu0 0
    %1918 = vmatpush1.bf16.msra.mxu0 0
    %1919 = vmatprep.subr.bf16.mxu0 0
    %1920 = vmatpush1.bf16.msra.mxu0 0
    %1921 = vmatprep.subr.bf16.mxu0 0
    %1922 = vmatpush1.bf16.msra.mxu0 0
    %1923 = vmatprep.subr.bf16.mxu0 0
    %1924 = vmatpush1.bf16.msra.mxu0 0
    %1925 = vmatprep.subr.bf16.mxu0 0
    %1926 = vmatpush1.bf16.msra.mxu0 0
    %1927 = vmatprep.subr.bf16.mxu0 0
    %1928 = vmatpush1.bf16.msra.mxu0 0
    %1929 = vmatprep.subr.bf16.mxu0 %v1866
    %1930 = vmatpush1.bf16.msra.mxu0 %v1865
    %1931 = vmatprep.subr.bf16.mxu0 0
    %1932 = vmatpush2.bf16.msra.mxu0 0
    %1933 = vmatprep.subr.bf16.mxu0 0
    %1934 = vmatpush2.bf16.msra.mxu0 0
    %1935 = vmatprep.subr.bf16.mxu0 0
    %1936 = vmatpush2.bf16.msra.mxu0 0
    %1937 = vmatprep.subr.bf16.mxu0 0
    %1938 = vmatpush2.bf16.msra.mxu0 0
    %1939 = vmatprep.subr.bf16.mxu0 0
    %1940 = vmatpush2.bf16.msra.mxu0 0
    %1941 = vmatprep.subr.bf16.mxu0 0
    %1942 = vmatpush2.bf16.msra.mxu0 0
    %1943 = vmatprep.subr.bf16.mxu0 0
    %1944 = vmatpush2.bf16.msra.mxu0 0
    %1945 = vmatprep.subr.bf16.mxu0 0
    %1946 = vmatpush2.bf16.msra.mxu0 0
    %1947 = vmatprep.mubr.bf16.mxu0 0
    %1948 = vmatmul.mubr.bf16.gmra.mxu0 %v1872
    %v1949 = vpop.f32.mrf.mxu0
    %v1950 = vadd.f32 0.0, %v1949
    %v1951 = vpop.f32.mrf.mxu0
    %v1952 = vadd.f32 0.0, %v1951
    %v1953 = vpop.f32.mrf.mxu0
    %v1954 = vpop.f32.mrf.mxu0
    %1955 = vdwg.mxu0
    %v1956 = vadd.f32 %v1804, %v1909
    %v1957 = vadd.f32 %v1806, %v1911
    %v1958 = vadd.f32 %v1845, %v1950
    %v1959 = vadd.f32 %v1847, %v1952
    %s1960 = scalar_lea.vmem %s3, 6
    %v1961 = vld [vmem:[%s1960] sm:$0x3]
    %1962 = vrot.lane.b32.xlu0 %v1649, 112
    %v1963 = vpop.permute.xlu0 %1962
    %1964 = vrot.lane.b32.xlu0 %v1650, 112
    %v1965 = vpop.permute.xlu0 %1964
    %1966 = vrot.lane.b32.xlu0 %v1651, 112
    %v1967 = vpop.permute.xlu0 %1966
    %1968 = vrot.lane.b32.xlu0 %v1652, 112
    %v1969 = vpop.permute.xlu0 %1968
    %1970 = vrot.lane.b32.xlu0 %v1653, 112
    %v1971 = vpop.permute.xlu0 %1970
    %v1972 = vsel %vm567, %v1963, %v1965
    %v1973 = vsel %vm567, %v1965, %v1967
    %v1974 = vsel %vm567, %v1967, %v1969
    %v1975 = vsel %vm567, %v1969, %v1971
    %v1981 = vsel %vm1680, %v1961, 0
    %1983 = vmatprep.subr.bf16.mxu0 0
    %1984 = vmatpush1.bf16.msra.mxu0 0
    %1985 = vmatprep.subr.bf16.mxu0 0
    %1986 = vmatpush1.bf16.msra.mxu0 0
    %1987 = vmatprep.subr.bf16.mxu0 0
    %1988 = vmatpush1.bf16.msra.mxu0 0
    %1989 = vmatprep.subr.bf16.mxu0 0
    %1990 = vmatpush1.bf16.msra.mxu0 0
    %1991 = vmatprep.subr.bf16.mxu0 0
    %1992 = vmatpush1.bf16.msra.mxu0 0
    %1993 = vmatprep.subr.bf16.mxu0 0
    %1994 = vmatpush1.bf16.msra.mxu0 0
    %1995 = vmatprep.subr.bf16.mxu0 0
    %1996 = vmatpush1.bf16.msra.mxu0 0
    %1997 = vmatprep.subr.bf16.mxu0 %v1973
    %1998 = vmatpush1.bf16.msra.mxu0 %v1972
    %1999 = vmatprep.subr.bf16.mxu0 0
    %2000 = vmatpush2.bf16.msra.mxu0 0
    %2001 = vmatprep.subr.bf16.mxu0 0
    %2002 = vmatpush2.bf16.msra.mxu0 0
    %2003 = vmatprep.subr.bf16.mxu0 0
    %2004 = vmatpush2.bf16.msra.mxu0 0
    %2005 = vmatprep.subr.bf16.mxu0 0
    %2006 = vmatpush2.bf16.msra.mxu0 0
    %2007 = vmatprep.subr.bf16.mxu0 0
    %2008 = vmatpush2.bf16.msra.mxu0 0
    %2009 = vmatprep.subr.bf16.mxu0 0
    %2010 = vmatpush2.bf16.msra.mxu0 0
    %2011 = vmatprep.subr.bf16.mxu0 0
    %2012 = vmatpush2.bf16.msra.mxu0 0
    %2013 = vmatprep.subr.bf16.mxu0 0
    %2014 = vmatpush2.bf16.msra.mxu0 0
    %2015 = vmatprep.mubr.bf16.mxu0 0
    %2016 = vmatmul.mubr.bf16.gmra.mxu0 %v1981
    %v2017 = vpop.f32.mrf.mxu0
    %v2018 = vadd.f32 0.0, %v2017
    %v2019 = vpop.f32.mrf.mxu0
    %v2020 = vadd.f32 0.0, %v2019
    %v2021 = vpop.f32.mrf.mxu0
    %v2022 = vpop.f32.mrf.mxu0
    %2023 = vdwg.mxu0
    %2024 = vmatprep.subr.bf16.mxu0 0
    %2025 = vmatpush1.bf16.msra.mxu0 0
    %2026 = vmatprep.subr.bf16.mxu0 0
    %2027 = vmatpush1.bf16.msra.mxu0 0
    %2028 = vmatprep.subr.bf16.mxu0 0
    %2029 = vmatpush1.bf16.msra.mxu0 0
    %2030 = vmatprep.subr.bf16.mxu0 0
    %2031 = vmatpush1.bf16.msra.mxu0 0
    %2032 = vmatprep.subr.bf16.mxu0 0
    %2033 = vmatpush1.bf16.msra.mxu0 0
    %2034 = vmatprep.subr.bf16.mxu0 0
    %2035 = vmatpush1.bf16.msra.mxu0 0
    %2036 = vmatprep.subr.bf16.mxu0 0
    %2037 = vmatpush1.bf16.msra.mxu0 0
    %2038 = vmatprep.subr.bf16.mxu0 %v1975
    %2039 = vmatpush1.bf16.msra.mxu0 %v1974
    %2040 = vmatprep.subr.bf16.mxu0 0
    %2041 = vmatpush2.bf16.msra.mxu0 0
    %2042 = vmatprep.subr.bf16.mxu0 0
    %2043 = vmatpush2.bf16.msra.mxu0 0
    %2044 = vmatprep.subr.bf16.mxu0 0
    %2045 = vmatpush2.bf16.msra.mxu0 0
    %2046 = vmatprep.subr.bf16.mxu0 0
    %2047 = vmatpush2.bf16.msra.mxu0 0
    %2048 = vmatprep.subr.bf16.mxu0 0
    %2049 = vmatpush2.bf16.msra.mxu0 0
    %2050 = vmatprep.subr.bf16.mxu0 0
    %2051 = vmatpush2.bf16.msra.mxu0 0
    %2052 = vmatprep.subr.bf16.mxu0 0
    %2053 = vmatpush2.bf16.msra.mxu0 0
    %2054 = vmatprep.subr.bf16.mxu0 0
    %2055 = vmatpush2.bf16.msra.mxu0 0
    %2056 = vmatprep.mubr.bf16.mxu0 0
    %2057 = vmatmul.mubr.bf16.gmra.mxu0 %v1981
    %v2058 = vpop.f32.mrf.mxu0
    %v2059 = vadd.f32 0.0, %v2058
    %v2060 = vpop.f32.mrf.mxu0
    %v2061 = vadd.f32 0.0, %v2060
    %v2062 = vpop.f32.mrf.mxu0
    %v2063 = vpop.f32.mrf.mxu0
    %2064 = vdwg.mxu0
    %v2065 = vadd.f32 %v1956, %v2018
    %v2066 = vadd.f32 %v1957, %v2020
    %v2067 = vadd.f32 %v1958, %v2059
    %v2068 = vadd.f32 %v1959, %v2061
    %s2069 = scalar_lea.vmem %s3, 8
    %v2070 = vld [vmem:[%s2069] sm:$0x3]
    %2071 = vrot.lane.b32.xlu0 %v1649, 111
    %v2072 = vpop.permute.xlu0 %2071
    %2073 = vrot.lane.b32.xlu0 %v1650, 111
    %v2074 = vpop.permute.xlu0 %2073
    %2075 = vrot.lane.b32.xlu0 %v1651, 111
    %v2076 = vpop.permute.xlu0 %2075
    %2077 = vrot.lane.b32.xlu0 %v1652, 111
    %v2078 = vpop.permute.xlu0 %2077
    %2079 = vrot.lane.b32.xlu0 %v1653, 111
    %v2080 = vpop.permute.xlu0 %2079
    %v2081 = vsel %vm745, %v2072, %v2074
    %v2082 = vsel %vm745, %v2074, %v2076
    %v2083 = vsel %vm745, %v2076, %v2078
    %v2084 = vsel %vm745, %v2078, %v2080
    %v2090 = vsel %vm1680, %v2070, 0
    %2092 = vmatprep.subr.bf16.mxu0 0
    %2093 = vmatpush1.bf16.msra.mxu0 0
    %2094 = vmatprep.subr.bf16.mxu0 0
    %2095 = vmatpush1.bf16.msra.mxu0 0
    %2096 = vmatprep.subr.bf16.mxu0 0
    %2097 = vmatpush1.bf16.msra.mxu0 0
    %2098 = vmatprep.subr.bf16.mxu0 0
    %2099 = vmatpush1.bf16.msra.mxu0 0
    %2100 = vmatprep.subr.bf16.mxu0 0
    %2101 = vmatpush1.bf16.msra.mxu0 0
    %2102 = vmatprep.subr.bf16.mxu0 0
    %2103 = vmatpush1.bf16.msra.mxu0 0
    %2104 = vmatprep.subr.bf16.mxu0 0
    %2105 = vmatpush1.bf16.msra.mxu0 0
    %2106 = vmatprep.subr.bf16.mxu0 %v2082
    %2107 = vmatpush1.bf16.msra.mxu0 %v2081
    %2108 = vmatprep.subr.bf16.mxu0 0
    %2109 = vmatpush2.bf16.msra.mxu0 0
    %2110 = vmatprep.subr.bf16.mxu0 0
    %2111 = vmatpush2.bf16.msra.mxu0 0
    %2112 = vmatprep.subr.bf16.mxu0 0
    %2113 = vmatpush2.bf16.msra.mxu0 0
    %2114 = vmatprep.subr.bf16.mxu0 0
    %2115 = vmatpush2.bf16.msra.mxu0 0
    %2116 = vmatprep.subr.bf16.mxu0 0
    %2117 = vmatpush2.bf16.msra.mxu0 0
    %2118 = vmatprep.subr.bf16.mxu0 0
    %2119 = vmatpush2.bf16.msra.mxu0 0
    %2120 = vmatprep.subr.bf16.mxu0 0
    %2121 = vmatpush2.bf16.msra.mxu0 0
    %2122 = vmatprep.subr.bf16.mxu0 0
    %2123 = vmatpush2.bf16.msra.mxu0 0
    %2124 = vmatprep.mubr.bf16.mxu0 0
    %2125 = vmatmul.mubr.bf16.gmra.mxu0 %v2090
    %v2126 = vpop.f32.mrf.mxu0
    %v2127 = vadd.f32 0.0, %v2126
    %v2128 = vpop.f32.mrf.mxu0
    %v2129 = vadd.f32 0.0, %v2128
    %v2130 = vpop.f32.mrf.mxu0
    %v2131 = vpop.f32.mrf.mxu0
    %2132 = vdwg.mxu0
    %2133 = vmatprep.subr.bf16.mxu0 0
    %2134 = vmatpush1.bf16.msra.mxu0 0
    %2135 = vmatprep.subr.bf16.mxu0 0
    %2136 = vmatpush1.bf16.msra.mxu0 0
    %2137 = vmatprep.subr.bf16.mxu0 0
    %2138 = vmatpush1.bf16.msra.mxu0 0
    %2139 = vmatprep.subr.bf16.mxu0 0
    %2140 = vmatpush1.bf16.msra.mxu0 0
    %2141 = vmatprep.subr.bf16.mxu0 0
    %2142 = vmatpush1.bf16.msra.mxu0 0
    %2143 = vmatprep.subr.bf16.mxu0 0
    %2144 = vmatpush1.bf16.msra.mxu0 0
    %2145 = vmatprep.subr.bf16.mxu0 0
    %2146 = vmatpush1.bf16.msra.mxu0 0
    %2147 = vmatprep.subr.bf16.mxu0 %v2084
    %2148 = vmatpush1.bf16.msra.mxu0 %v2083
    %2149 = vmatprep.subr.bf16.mxu0 0
    %2150 = vmatpush2.bf16.msra.mxu0 0
    %2151 = vmatprep.subr.bf16.mxu0 0
    %2152 = vmatpush2.bf16.msra.mxu0 0
    %2153 = vmatprep.subr.bf16.mxu0 0
    %2154 = vmatpush2.bf16.msra.mxu0 0
    %2155 = vmatprep.subr.bf16.mxu0 0
    %2156 = vmatpush2.bf16.msra.mxu0 0
    %2157 = vmatprep.subr.bf16.mxu0 0
    %2158 = vmatpush2.bf16.msra.mxu0 0
    %2159 = vmatprep.subr.bf16.mxu0 0
    %2160 = vmatpush2.bf16.msra.mxu0 0
    %2161 = vmatprep.subr.bf16.mxu0 0
    %2162 = vmatpush2.bf16.msra.mxu0 0
    %2163 = vmatprep.subr.bf16.mxu0 0
    %2164 = vmatpush2.bf16.msra.mxu0 0
    %2165 = vmatprep.mubr.bf16.mxu0 0
    %2166 = vmatmul.mubr.bf16.gmra.mxu0 %v2090
    %v2167 = vpop.f32.mrf.mxu0
    %v2168 = vadd.f32 0.0, %v2167
    %v2169 = vpop.f32.mrf.mxu0
    %v2170 = vadd.f32 0.0, %v2169
    %v2171 = vpop.f32.mrf.mxu0
    %v2172 = vpop.f32.mrf.mxu0
    %2173 = vdwg.mxu0
    %v2174 = vadd.f32 %v2065, %v2127
    %v2175 = vadd.f32 %v2066, %v2129
    %v2176 = vadd.f32 %v2067, %v2168
    %v2177 = vadd.f32 %v2068, %v2170
    %s2178 = scalar_lea.vmem %s3, 10
    %v2179 = vld [vmem:[%s2178] sm:$0x3]
    %2180 = vrot.lane.b32.xlu0 %v1649, 110
    %v2181 = vpop.permute.xlu0 %2180
    %2182 = vrot.lane.b32.xlu0 %v1650, 110
    %v2183 = vpop.permute.xlu0 %2182
    %2184 = vrot.lane.b32.xlu0 %v1651, 110
    %v2185 = vpop.permute.xlu0 %2184
    %2186 = vrot.lane.b32.xlu0 %v1652, 110
    %v2187 = vpop.permute.xlu0 %2186
    %2188 = vrot.lane.b32.xlu0 %v1653, 110
    %v2189 = vpop.permute.xlu0 %2188
    %v2190 = vsel %vm923, %v2181, %v2183
    %v2191 = vsel %vm923, %v2183, %v2185
    %v2192 = vsel %vm923, %v2185, %v2187
    %v2193 = vsel %vm923, %v2187, %v2189
    %v2199 = vsel %vm1680, %v2179, 0
    %2201 = vmatprep.subr.bf16.mxu0 0
    %2202 = vmatpush1.bf16.msra.mxu0 0
    %2203 = vmatprep.subr.bf16.mxu0 0
    %2204 = vmatpush1.bf16.msra.mxu0 0
    %2205 = vmatprep.subr.bf16.mxu0 0
    %2206 = vmatpush1.bf16.msra.mxu0 0
    %2207 = vmatprep.subr.bf16.mxu0 0
    %2208 = vmatpush1.bf16.msra.mxu0 0
    %2209 = vmatprep.subr.bf16.mxu0 0
    %2210 = vmatpush1.bf16.msra.mxu0 0
    %2211 = vmatprep.subr.bf16.mxu0 0
    %2212 = vmatpush1.bf16.msra.mxu0 0
    %2213 = vmatprep.subr.bf16.mxu0 0
    %2214 = vmatpush1.bf16.msra.mxu0 0
    %2215 = vmatprep.subr.bf16.mxu0 %v2191
    %2216 = vmatpush1.bf16.msra.mxu0 %v2190
    %2217 = vmatprep.subr.bf16.mxu0 0
    %2218 = vmatpush2.bf16.msra.mxu0 0
    %2219 = vmatprep.subr.bf16.mxu0 0
    %2220 = vmatpush2.bf16.msra.mxu0 0
    %2221 = vmatprep.subr.bf16.mxu0 0
    %2222 = vmatpush2.bf16.msra.mxu0 0
    %2223 = vmatprep.subr.bf16.mxu0 0
    %2224 = vmatpush2.bf16.msra.mxu0 0
    %2225 = vmatprep.subr.bf16.mxu0 0
    %2226 = vmatpush2.bf16.msra.mxu0 0
    %2227 = vmatprep.subr.bf16.mxu0 0
    %2228 = vmatpush2.bf16.msra.mxu0 0
    %2229 = vmatprep.subr.bf16.mxu0 0
    %2230 = vmatpush2.bf16.msra.mxu0 0
    %2231 = vmatprep.subr.bf16.mxu0 0
    %2232 = vmatpush2.bf16.msra.mxu0 0
    %2233 = vmatprep.mubr.bf16.mxu0 0
    %2234 = vmatmul.mubr.bf16.gmra.mxu0 %v2199
    %v2235 = vpop.f32.mrf.mxu0
    %v2236 = vadd.f32 0.0, %v2235
    %v2237 = vpop.f32.mrf.mxu0
    %v2238 = vadd.f32 0.0, %v2237
    %v2239 = vpop.f32.mrf.mxu0
    %v2240 = vpop.f32.mrf.mxu0
    %2241 = vdwg.mxu0
    %2242 = vmatprep.subr.bf16.mxu0 0
    %2243 = vmatpush1.bf16.msra.mxu0 0
    %2244 = vmatprep.subr.bf16.mxu0 0
    %2245 = vmatpush1.bf16.msra.mxu0 0
    %2246 = vmatprep.subr.bf16.mxu0 0
    %2247 = vmatpush1.bf16.msra.mxu0 0
    %2248 = vmatprep.subr.bf16.mxu0 0
    %2249 = vmatpush1.bf16.msra.mxu0 0
    %2250 = vmatprep.subr.bf16.mxu0 0
    %2251 = vmatpush1.bf16.msra.mxu0 0
    %2252 = vmatprep.subr.bf16.mxu0 0
    %2253 = vmatpush1.bf16.msra.mxu0 0
    %2254 = vmatprep.subr.bf16.mxu0 0
    %2255 = vmatpush1.bf16.msra.mxu0 0
    %2256 = vmatprep.subr.bf16.mxu0 %v2193
    %2257 = vmatpush1.bf16.msra.mxu0 %v2192
    %2258 = vmatprep.subr.bf16.mxu0 0
    %2259 = vmatpush2.bf16.msra.mxu0 0
    %2260 = vmatprep.subr.bf16.mxu0 0
    %2261 = vmatpush2.bf16.msra.mxu0 0
    %2262 = vmatprep.subr.bf16.mxu0 0
    %2263 = vmatpush2.bf16.msra.mxu0 0
    %2264 = vmatprep.subr.bf16.mxu0 0
    %2265 = vmatpush2.bf16.msra.mxu0 0
    %2266 = vmatprep.subr.bf16.mxu0 0
    %2267 = vmatpush2.bf16.msra.mxu0 0
    %2268 = vmatprep.subr.bf16.mxu0 0
    %2269 = vmatpush2.bf16.msra.mxu0 0
    %2270 = vmatprep.subr.bf16.mxu0 0
    %2271 = vmatpush2.bf16.msra.mxu0 0
    %2272 = vmatprep.subr.bf16.mxu0 0
    %2273 = vmatpush2.bf16.msra.mxu0 0
    %2274 = vmatprep.mubr.bf16.mxu0 0
    %2275 = vmatmul.mubr.bf16.gmra.mxu0 %v2199
    %v2276 = vpop.f32.mrf.mxu0
    %v2277 = vadd.f32 0.0, %v2276
    %v2278 = vpop.f32.mrf.mxu0
    %v2279 = vadd.f32 0.0, %v2278
    %v2280 = vpop.f32.mrf.mxu0
    %v2281 = vpop.f32.mrf.mxu0
    %2282 = vdwg.mxu0
    %v2283 = vadd.f32 %v2174, %v2236
    %v2284 = vadd.f32 %v2175, %v2238
    %v2285 = vadd.f32 %v2176, %v2277
    %v2286 = vadd.f32 %v2177, %v2279
    %s2287 = scalar_lea.vmem %s3, 12
    %v2288 = vld [vmem:[%s2287] sm:$0x3]
    %2289 = vrot.lane.b32.xlu0 %v1649, 96
    %v2290 = vpop.permute.xlu0 %2289
    %2291 = vrot.lane.b32.xlu0 %v1650, 96
    %v2292 = vpop.permute.xlu0 %2291
    %2293 = vrot.lane.b32.xlu0 %v1651, 96
    %v2294 = vpop.permute.xlu0 %2293
    %2295 = vrot.lane.b32.xlu0 %v1652, 96
    %v2296 = vpop.permute.xlu0 %2295
    %2297 = vrot.lane.b32.xlu0 %v1653, 96
    %v2298 = vpop.permute.xlu0 %2297
    %v2299 = vsel %vm1101, %v2290, %v2292
    %v2300 = vsel %vm1101, %v2292, %v2294
    %v2301 = vsel %vm1101, %v2294, %v2296
    %v2302 = vsel %vm1101, %v2296, %v2298
    %v2308 = vsel %vm1680, %v2288, 0
    %2310 = vmatprep.subr.bf16.mxu0 0
    %2311 = vmatpush1.bf16.msra.mxu0 0
    %2312 = vmatprep.subr.bf16.mxu0 0
    %2313 = vmatpush1.bf16.msra.mxu0 0
    %2314 = vmatprep.subr.bf16.mxu0 0
    %2315 = vmatpush1.bf16.msra.mxu0 0
    %2316 = vmatprep.subr.bf16.mxu0 0
    %2317 = vmatpush1.bf16.msra.mxu0 0
    %2318 = vmatprep.subr.bf16.mxu0 0
    %2319 = vmatpush1.bf16.msra.mxu0 0
    %2320 = vmatprep.subr.bf16.mxu0 0
    %2321 = vmatpush1.bf16.msra.mxu0 0
    %2322 = vmatprep.subr.bf16.mxu0 0
    %2323 = vmatpush1.bf16.msra.mxu0 0
    %2324 = vmatprep.subr.bf16.mxu0 %v2300
    %2325 = vmatpush1.bf16.msra.mxu0 %v2299
    %2326 = vmatprep.subr.bf16.mxu0 0
    %2327 = vmatpush2.bf16.msra.mxu0 0
    %2328 = vmatprep.subr.bf16.mxu0 0
    %2329 = vmatpush2.bf16.msra.mxu0 0
    %2330 = vmatprep.subr.bf16.mxu0 0
    %2331 = vmatpush2.bf16.msra.mxu0 0
    %2332 = vmatprep.subr.bf16.mxu0 0
    %2333 = vmatpush2.bf16.msra.mxu0 0
    %2334 = vmatprep.subr.bf16.mxu0 0
    %2335 = vmatpush2.bf16.msra.mxu0 0
    %2336 = vmatprep.subr.bf16.mxu0 0
    %2337 = vmatpush2.bf16.msra.mxu0 0
    %2338 = vmatprep.subr.bf16.mxu0 0
    %2339 = vmatpush2.bf16.msra.mxu0 0
    %2340 = vmatprep.subr.bf16.mxu0 0
    %2341 = vmatpush2.bf16.msra.mxu0 0
    %2342 = vmatprep.mubr.bf16.mxu0 0
    %2343 = vmatmul.mubr.bf16.gmra.mxu0 %v2308
    %v2344 = vpop.f32.mrf.mxu0
    %v2345 = vadd.f32 0.0, %v2344
    %v2346 = vpop.f32.mrf.mxu0
    %v2347 = vadd.f32 0.0, %v2346
    %v2348 = vpop.f32.mrf.mxu0
    %v2349 = vpop.f32.mrf.mxu0
    %2350 = vdwg.mxu0
    %2351 = vmatprep.subr.bf16.mxu0 0
    %2352 = vmatpush1.bf16.msra.mxu0 0
    %2353 = vmatprep.subr.bf16.mxu0 0
    %2354 = vmatpush1.bf16.msra.mxu0 0
    %2355 = vmatprep.subr.bf16.mxu0 0
    %2356 = vmatpush1.bf16.msra.mxu0 0
    %2357 = vmatprep.subr.bf16.mxu0 0
    %2358 = vmatpush1.bf16.msra.mxu0 0
    %2359 = vmatprep.subr.bf16.mxu0 0
    %2360 = vmatpush1.bf16.msra.mxu0 0
    %2361 = vmatprep.subr.bf16.mxu0 0
    %2362 = vmatpush1.bf16.msra.mxu0 0
    %2363 = vmatprep.subr.bf16.mxu0 0
    %2364 = vmatpush1.bf16.msra.mxu0 0
    %2365 = vmatprep.subr.bf16.mxu0 %v2302
    %2366 = vmatpush1.bf16.msra.mxu0 %v2301
    %2367 = vmatprep.subr.bf16.mxu0 0
    %2368 = vmatpush2.bf16.msra.mxu0 0
    %2369 = vmatprep.subr.bf16.mxu0 0
    %2370 = vmatpush2.bf16.msra.mxu0 0
    %2371 = vmatprep.subr.bf16.mxu0 0
    %2372 = vmatpush2.bf16.msra.mxu0 0
    %2373 = vmatprep.subr.bf16.mxu0 0
    %2374 = vmatpush2.bf16.msra.mxu0 0
    %2375 = vmatprep.subr.bf16.mxu0 0
    %2376 = vmatpush2.bf16.msra.mxu0 0
    %2377 = vmatprep.subr.bf16.mxu0 0
    %2378 = vmatpush2.bf16.msra.mxu0 0
    %2379 = vmatprep.subr.bf16.mxu0 0
    %2380 = vmatpush2.bf16.msra.mxu0 0
    %2381 = vmatprep.subr.bf16.mxu0 0
    %2382 = vmatpush2.bf16.msra.mxu0 0
    %2383 = vmatprep.mubr.bf16.mxu0 0
    %2384 = vmatmul.mubr.bf16.gmra.mxu0 %v2308
    %v2385 = vpop.f32.mrf.mxu0
    %v2386 = vadd.f32 0.0, %v2385
    %v2387 = vpop.f32.mrf.mxu0
    %v2388 = vadd.f32 0.0, %v2387
    %v2389 = vpop.f32.mrf.mxu0
    %v2390 = vpop.f32.mrf.mxu0
    %2391 = vdwg.mxu0
    %v2392 = vadd.f32 %v2283, %v2345
    %v2393 = vadd.f32 %v2284, %v2347
    %v2394 = vadd.f32 %v2285, %v2386
    %v2395 = vadd.f32 %v2286, %v2388
    %s2396 = scalar_lea.vmem %s3, 14
    %v2397 = vld [vmem:[%s2396] sm:$0x3]
    %2398 = vrot.lane.b32.xlu0 %v1649, 95
    %v2399 = vpop.permute.xlu0 %2398
    %2400 = vrot.lane.b32.xlu0 %v1650, 95
    %v2401 = vpop.permute.xlu0 %2400
    %2402 = vrot.lane.b32.xlu0 %v1651, 95
    %v2403 = vpop.permute.xlu0 %2402
    %2404 = vrot.lane.b32.xlu0 %v1652, 95
    %v2405 = vpop.permute.xlu0 %2404
    %2406 = vrot.lane.b32.xlu0 %v1653, 95
    %v2407 = vpop.permute.xlu0 %2406
    %v2408 = vsel %vm1279, %v2399, %v2401
    %v2409 = vsel %vm1279, %v2401, %v2403
    %v2410 = vsel %vm1279, %v2403, %v2405
    %v2411 = vsel %vm1279, %v2405, %v2407
    %v2417 = vsel %vm1680, %v2397, 0
    %2419 = vmatprep.subr.bf16.mxu0 0
    %2420 = vmatpush1.bf16.msra.mxu0 0
    %2421 = vmatprep.subr.bf16.mxu0 0
    %2422 = vmatpush1.bf16.msra.mxu0 0
    %2423 = vmatprep.subr.bf16.mxu0 0
    %2424 = vmatpush1.bf16.msra.mxu0 0
    %2425 = vmatprep.subr.bf16.mxu0 0
    %2426 = vmatpush1.bf16.msra.mxu0 0
    %2427 = vmatprep.subr.bf16.mxu0 0
    %2428 = vmatpush1.bf16.msra.mxu0 0
    %2429 = vmatprep.subr.bf16.mxu0 0
    %2430 = vmatpush1.bf16.msra.mxu0 0
    %2431 = vmatprep.subr.bf16.mxu0 0
    %2432 = vmatpush1.bf16.msra.mxu0 0
    %2433 = vmatprep.subr.bf16.mxu0 %v2409
    %2434 = vmatpush1.bf16.msra.mxu0 %v2408
    %2435 = vmatprep.subr.bf16.mxu0 0
    %2436 = vmatpush2.bf16.msra.mxu0 0
    %2437 = vmatprep.subr.bf16.mxu0 0
    %2438 = vmatpush2.bf16.msra.mxu0 0
    %2439 = vmatprep.subr.bf16.mxu0 0
    %2440 = vmatpush2.bf16.msra.mxu0 0
    %2441 = vmatprep.subr.bf16.mxu0 0
    %2442 = vmatpush2.bf16.msra.mxu0 0
    %2443 = vmatprep.subr.bf16.mxu0 0
    %2444 = vmatpush2.bf16.msra.mxu0 0
    %2445 = vmatprep.subr.bf16.mxu0 0
    %2446 = vmatpush2.bf16.msra.mxu0 0
    %2447 = vmatprep.subr.bf16.mxu0 0
    %2448 = vmatpush2.bf16.msra.mxu0 0
    %2449 = vmatprep.subr.bf16.mxu0 0
    %2450 = vmatpush2.bf16.msra.mxu0 0
    %2451 = vmatprep.mubr.bf16.mxu0 0
    %2452 = vmatmul.mubr.bf16.gmra.mxu0 %v2417
    %v2453 = vpop.f32.mrf.mxu0
    %v2454 = vadd.f32 0.0, %v2453
    %v2455 = vpop.f32.mrf.mxu0
    %v2456 = vadd.f32 0.0, %v2455
    %v2457 = vpop.f32.mrf.mxu0
    %v2458 = vpop.f32.mrf.mxu0
    %2459 = vdwg.mxu0
    %2460 = vmatprep.subr.bf16.mxu0 0
    %2461 = vmatpush1.bf16.msra.mxu0 0
    %2462 = vmatprep.subr.bf16.mxu0 0
    %2463 = vmatpush1.bf16.msra.mxu0 0
    %2464 = vmatprep.subr.bf16.mxu0 0
    %2465 = vmatpush1.bf16.msra.mxu0 0
    %2466 = vmatprep.subr.bf16.mxu0 0
    %2467 = vmatpush1.bf16.msra.mxu0 0
    %2468 = vmatprep.subr.bf16.mxu0 0
    %2469 = vmatpush1.bf16.msra.mxu0 0
    %2470 = vmatprep.subr.bf16.mxu0 0
    %2471 = vmatpush1.bf16.msra.mxu0 0
    %2472 = vmatprep.subr.bf16.mxu0 0
    %2473 = vmatpush1.bf16.msra.mxu0 0
    %2474 = vmatprep.subr.bf16.mxu0 %v2411
    %2475 = vmatpush1.bf16.msra.mxu0 %v2410
    %2476 = vmatprep.subr.bf16.mxu0 0
    %2477 = vmatpush2.bf16.msra.mxu0 0
    %2478 = vmatprep.subr.bf16.mxu0 0
    %2479 = vmatpush2.bf16.msra.mxu0 0
    %2480 = vmatprep.subr.bf16.mxu0 0
    %2481 = vmatpush2.bf16.msra.mxu0 0
    %2482 = vmatprep.subr.bf16.mxu0 0
    %2483 = vmatpush2.bf16.msra.mxu0 0
    %2484 = vmatprep.subr.bf16.mxu0 0
    %2485 = vmatpush2.bf16.msra.mxu0 0
    %2486 = vmatprep.subr.bf16.mxu0 0
    %2487 = vmatpush2.bf16.msra.mxu0 0
    %2488 = vmatprep.subr.bf16.mxu0 0
    %2489 = vmatpush2.bf16.msra.mxu0 0
    %2490 = vmatprep.subr.bf16.mxu0 0
    %2491 = vmatpush2.bf16.msra.mxu0 0
    %2492 = vmatprep.mubr.bf16.mxu0 0
    %2493 = vmatmul.mubr.bf16.gmra.mxu0 %v2417
    %v2494 = vpop.f32.mrf.mxu0
    %v2495 = vadd.f32 0.0, %v2494
    %v2496 = vpop.f32.mrf.mxu0
    %v2497 = vadd.f32 0.0, %v2496
    %v2498 = vpop.f32.mrf.mxu0
    %v2499 = vpop.f32.mrf.mxu0
    %2500 = vdwg.mxu0
    %v2501 = vadd.f32 %v2392, %v2454
    %v2502 = vadd.f32 %v2393, %v2456
    %v2503 = vadd.f32 %v2394, %v2495
    %v2504 = vadd.f32 %v2395, %v2497
    %s2505 = scalar_lea.vmem %s3, 16
    %v2506 = vld [vmem:[%s2505] sm:$0x3]
    %2507 = vrot.lane.b32.xlu0 %v1649, 94
    %v2508 = vpop.permute.xlu0 %2507
    %2509 = vrot.lane.b32.xlu0 %v1650, 94
    %v2510 = vpop.permute.xlu0 %2509
    %2511 = vrot.lane.b32.xlu0 %v1651, 94
    %v2512 = vpop.permute.xlu0 %2511
    %2513 = vrot.lane.b32.xlu0 %v1652, 94
    %v2514 = vpop.permute.xlu0 %2513
    %2515 = vrot.lane.b32.xlu0 %v1653, 94
    %v2516 = vpop.permute.xlu0 %2515
    %v2517 = vsel %vm1457, %v2508, %v2510
    %v2518 = vsel %vm1457, %v2510, %v2512
    %v2519 = vsel %vm1457, %v2512, %v2514
    %v2520 = vsel %vm1457, %v2514, %v2516
    %v2526 = vsel %vm1680, %v2506, 0
    %2528 = vmatprep.subr.bf16.mxu0 0
    %2529 = vmatpush1.bf16.msra.mxu0 0
    %2530 = vmatprep.subr.bf16.mxu0 0
    %2531 = vmatpush1.bf16.msra.mxu0 0
    %2532 = vmatprep.subr.bf16.mxu0 0
    %2533 = vmatpush1.bf16.msra.mxu0 0
    %2534 = vmatprep.subr.bf16.mxu0 0
    %2535 = vmatpush1.bf16.msra.mxu0 0
    %2536 = vmatprep.subr.bf16.mxu0 0
    %2537 = vmatpush1.bf16.msra.mxu0 0
    %2538 = vmatprep.subr.bf16.mxu0 0
    %2539 = vmatpush1.bf16.msra.mxu0 0
    %2540 = vmatprep.subr.bf16.mxu0 0
    %2541 = vmatpush1.bf16.msra.mxu0 0
    %2542 = vmatprep.subr.bf16.mxu0 %v2518
    %2543 = vmatpush1.bf16.msra.mxu0 %v2517
    %2544 = vmatprep.subr.bf16.mxu0 0
    %2545 = vmatpush2.bf16.msra.mxu0 0
    %2546 = vmatprep.subr.bf16.mxu0 0
    %2547 = vmatpush2.bf16.msra.mxu0 0
    %2548 = vmatprep.subr.bf16.mxu0 0
    %2549 = vmatpush2.bf16.msra.mxu0 0
    %2550 = vmatprep.subr.bf16.mxu0 0
    %2551 = vmatpush2.bf16.msra.mxu0 0
    %2552 = vmatprep.subr.bf16.mxu0 0
    %2553 = vmatpush2.bf16.msra.mxu0 0
    %2554 = vmatprep.subr.bf16.mxu0 0
    %2555 = vmatpush2.bf16.msra.mxu0 0
    %2556 = vmatprep.subr.bf16.mxu0 0
    %2557 = vmatpush2.bf16.msra.mxu0 0
    %2558 = vmatprep.subr.bf16.mxu0 0
    %2559 = vmatpush2.bf16.msra.mxu0 0
    %2560 = vmatprep.mubr.bf16.mxu0 0
    %2561 = vmatmul.mubr.bf16.gmra.mxu0 %v2526
    %v2562 = vpop.f32.mrf.mxu0
    %v2563 = vadd.f32 0.0, %v2562
    %v2564 = vpop.f32.mrf.mxu0
    %v2565 = vadd.f32 0.0, %v2564
    %v2566 = vpop.f32.mrf.mxu0
    %v2567 = vpop.f32.mrf.mxu0
    %2568 = vdwg.mxu0
    %2569 = vmatprep.subr.bf16.mxu0 0
    %2570 = vmatpush1.bf16.msra.mxu0 0
    %2571 = vmatprep.subr.bf16.mxu0 0
    %2572 = vmatpush1.bf16.msra.mxu0 0
    %2573 = vmatprep.subr.bf16.mxu0 0
    %2574 = vmatpush1.bf16.msra.mxu0 0
    %2575 = vmatprep.subr.bf16.mxu0 0
    %2576 = vmatpush1.bf16.msra.mxu0 0
    %2577 = vmatprep.subr.bf16.mxu0 0
    %2578 = vmatpush1.bf16.msra.mxu0 0
    %2579 = vmatprep.subr.bf16.mxu0 0
    %2580 = vmatpush1.bf16.msra.mxu0 0
    %2581 = vmatprep.subr.bf16.mxu0 0
    %2582 = vmatpush1.bf16.msra.mxu0 0
    %2583 = vmatprep.subr.bf16.mxu0 %v2520
    %2584 = vmatpush1.bf16.msra.mxu0 %v2519
    %2585 = vmatprep.subr.bf16.mxu0 0
    %2586 = vmatpush2.bf16.msra.mxu0 0
    %2587 = vmatprep.subr.bf16.mxu0 0
    %2588 = vmatpush2.bf16.msra.mxu0 0
    %2589 = vmatprep.subr.bf16.mxu0 0
    %2590 = vmatpush2.bf16.msra.mxu0 0
    %2591 = vmatprep.subr.bf16.mxu0 0
    %2592 = vmatpush2.bf16.msra.mxu0 0
    %2593 = vmatprep.subr.bf16.mxu0 0
    %2594 = vmatpush2.bf16.msra.mxu0 0
    %2595 = vmatprep.subr.bf16.mxu0 0
    %2596 = vmatpush2.bf16.msra.mxu0 0
    %2597 = vmatprep.subr.bf16.mxu0 0
    %2598 = vmatpush2.bf16.msra.mxu0 0
    %2599 = vmatprep.subr.bf16.mxu0 0
    %2600 = vmatpush2.bf16.msra.mxu0 0
    %2601 = vmatprep.mubr.bf16.mxu0 0
    %2602 = vmatmul.mubr.bf16.gmra.mxu0 %v2526
    %v2603 = vpop.f32.mrf.mxu0
    %v2604 = vadd.f32 0.0, %v2603
    %v2605 = vpop.f32.mrf.mxu0
    %v2606 = vadd.f32 0.0, %v2605
    %v2607 = vpop.f32.mrf.mxu0
    %v2608 = vpop.f32.mrf.mxu0
    %2609 = vdwg.mxu0
    %v2610 = vadd.f32 %v2501, %v2563
    %v2611 = vadd.f32 %v2502, %v2565
    %v2612 = vadd.f32 %v2503, %v2604
    %v2613 = vadd.f32 %v2504, %v2606
    %v2614 = vld [vmem:[%s4] sm:$0xf]
    %2616 = vset.pattern.permute.xlu0 0
    %2617 = vperm.xlu0 %2616, %v2614
    %v2618 = vpop.permute.xlu0 %2617
    %v2620 = vadd.f32 %v2610, %v2618
    %v2621 = vadd.f32 %v2611, %v2618
    %v2622 = vadd.f32 %v2612, %v2618
    %v2623 = vadd.f32 %v2613, %v2618
    %v2624 = vmax.f32 %v2620, 0.0
    %v2625 = vmax.f32 %v2621, 0.0
    %v2626 = vmax.f32 %v2622, 0.0
    %v2627 = vmax.f32 %v2623, 0.0
    %v2628 = vld [vmem:[%s5] sm:$0xff]
    %v2629 = vld [vmem:[#allocation2] sm:$0x1]
    %v2631 = vcombine.high %v2628, %v2628
    %v2633 = vmul.f32 %v2624, %v2628
    %v2634 = vmul.f32 %v2625, %v2631
    %vm2635 = vcmask 1043456
    %v2636 = vsel %vm2635, %v2633, 0.0
    %v2637 = vsel %vm2635, %v2634, 0.0
    %v2638 = vadd.f32 %v2636, %v2637
    %2639 = vadd.xlane.f32.xlu0 %v2638
    %v2640 = vpop.xlane.xlu0 %2639
    %v2642 = vrot.slane %v2640, 1
    %v2644 = vadd.f32 %v2640, %v2642
    %v2645 = vrot.slane %v2640, 2
    %v2647 = vadd.f32 %v2644, %v2645
    %v2648 = vrot.slane %v2640, 3
    %v2650 = vadd.f32 %v2647, %v2648
    %v2651 = vadd.f32 %v2650, %v2629
    %vm2652 = vcmask 0
    %2653 = vst.msk [vmem:[#allocation3] sm:$0x1] %vm2652, %v2651
    %v2654 = vmul.f32 %v2626, %v2628
    %v2655 = vmul.f32 %v2627, %v2631
    %v2656 = vsel %vm2635, %v2654, 0.0
    %v2657 = vsel %vm2635, %v2655, 0.0
    %v2658 = vadd.f32 %v2656, %v2657
    %2659 = vadd.xlane.f32.xlu0 %v2658
    %v2660 = vpop.xlane.xlu0 %2659
    %v2662 = vrot.slane %v2660, 1
    %v2664 = vadd.f32 %v2660, %v2662
    %v2665 = vrot.slane %v2660, 2
    %v2667 = vadd.f32 %v2664, %v2665
    %v2668 = vrot.slane %v2660, 3
    %v2670 = vadd.f32 %v2667, %v2668
    %v2671 = vadd.f32 %v2670, %v2629
    %2673 = vrot.lane.b32.xlu0 %v2671, 1
    %v2674 = vpop.permute.xlu0 %2673
    %vm2676 = vcmask 8200
    %2677 = vst.msk [vmem:[#allocation3] sm:$0x1] %vm2676, %v2674
    // Predicated region
    $region30: #{cnn2_forward.1} parent=1 // pred_check
      _
    $region31: #{cnn2_forward.1} parent=1 // pred_check_branch
      %2679 = sbr.rel (0) target = $region33
    $region32: #{cnn2_forward.1} parent=1 // pred_region
      %s2681 = ssub.s32 16, 16
      %2682 = vsyncadd [#allocation4], %s2681
      %s2684 = sshll.u32 [#allocation3], 4
      %s2685 = int_to_ptr.vmem [resolvable:$true] %s2684
      %2687 = dma.vmem_to_hbm [thread:$0]  %s2685, 16, %s7, [#allocation4]
    $region33: #{cnn2_forward.1} parent=1 // pred_fallthru
      _
    // Predicated region
    $region34: #{cnn2_forward.1} parent=1 // pred_check
      _
    $region35: #{cnn2_forward.1} parent=1 // pred_check_branch
      %2689 = sbr.rel (0) target = $region37
    $region36: #{cnn2_forward.1} parent=1 // pred_region
      %2690 = dma.done [#allocation4], 16
    $region37: #{cnn2_forward.1} parent=1 // pred_fallthru
      _
    %2691 = vsyncpa [#allocation4], 1

</llo_original>
